<compile_context>
chip_gen: v6e
topology: v6e:2x2x1
jax: 0.10.0
libtpu: 0.0.40
codegen_flags: <defaults>
</compile_context>

<pallas_src>
import jax
import jax.numpy as jnp
from jax import lax
from jax.experimental import pallas as pl
from jax.experimental.pallas import tpu as pltpu

BN_EPS = 1e-5
LANE = 128
COMPUTE_DTYPE = jnp.bfloat16
N_PAR = 2                          # parallel grid axis for pass 1 (v7x megacore)
VMEM_BUDGET = 40 * 1024 * 1024     # sizing budget for pass-1 tiles
VMEM_LIMIT = 48 * 1024 * 1024      # explicit scoped-VMEM limit (< 64 MiB v7x physical)
PASS2_TILE_M = 2048                # target rows per pass-2 tile (mem-bound)


def _round_up(x, m):
    return (x + m - 1) // m * m


# ---------------------------------------------------------------------------
# Pass 1: conv-as-matmul (MXU) + per-channel sum / sum-of-squares accumulation.
# ---------------------------------------------------------------------------
def _conv_stats_kernel(p_ref, w_ref, y_ref, sum_ref, sq_ref):
    acc = jnp.dot(p_ref[...], w_ref[...], preferred_element_type=jnp.float32)
    y_ref[...] = acc.astype(y_ref.dtype)          # bf16 conv intermediate

    @pl.when(pl.program_id(1) == 0)
    def _():
        sum_ref[...] = jnp.zeros_like(sum_ref)
        sq_ref[...] = jnp.zeros_like(sq_ref)

    # Partial-sum down to (8, C_pad): pure VPU adds over vreg groups, no XLU
    # cross-sublane reduction per tile.  Final 8->1 collapse happens in fp32 glue.
    a3 = acc.reshape(acc.shape[0] // 8, 8, acc.shape[1])
    sum_ref[...] += jnp.sum(a3, axis=0)
    sq_ref[...] += jnp.sum(a3 * a3, axis=0)


# ---------------------------------------------------------------------------
# Pass 2: y * scale + shift -> ReLU (mem-bound elementwise, bf16 in / bf16 out).
# ---------------------------------------------------------------------------
def _bn_relu_kernel(y_ref, scale_ref, shift_ref, o_ref):
    y = y_ref[...].astype(jnp.float32)
    o_ref[...] = jnp.maximum(y * scale_ref[...] + shift_ref[...], 0.0
                             ).astype(o_ref.dtype)


def _im2col(x_nhwc, stride):
    """3x3 / pad=1 im2col. Returns ((M, 9*Cin_x) bf16 patches, Hout, Wout)."""
    N, H, W, Cin = x_nhwc.shape
    KH = KW = 3
    pad = 1
    Hout = (H + 2 * pad - KH) // stride + 1
    Wout = (W + 2 * pad - KW) // stride + 1
    xp = jnp.pad(x_nhwc.astype(COMPUTE_DTYPE),
                 ((0, 0), (pad, pad), (pad, pad), (0, 0)))
    taps = []
    for ky in range(KH):
        for kx in range(KW):
            taps.append(xp[:, ky:ky + (Hout - 1) * stride + 1:stride,
                              kx:kx + (Wout - 1) * stride + 1:stride, :])
    patches = jnp.concatenate(taps, axis=-1)            # (N,Hout,Wout,9*Cin) bf16
    return patches.reshape(N * Hout * Wout, KH * KW * Cin), Hout, Wout


def _pick_tile_m(M, K_pad, C_pad):
    """Largest 16-aligned pass-1 row tile fitting the VMEM budget (dbl-buffered)."""
    fixed = 2 * K_pad * C_pad * 2 + 2 * 2 * 8 * C_pad * 4   # weights + stat residents
    per_row = 2 * (K_pad + C_pad) * 2                       # bf16 patch + bf16 y rows
    t = (VMEM_BUDGET - fixed) // per_row
    t = min(t, 1024, _round_up(pl.cdiv(M, N_PAR), 16))      # keep >= N_PAR tiles total
    return max((t // 16) * 16, 16)


def _conv_bn_relu_block(x_nhwc, w_oihw, gamma, beta, stride):
    """One Conv2DNormedReLUBlock on channel-padded NHWC input.

    x_nhwc: (N,H,W,Cin_x) with Cin_x >= w.shape[1]; extra channels are exact zeros.
    Returns (N,Hout,Wout,C_pad) bf16; channels >= Cout are exact zeros.
    """
    N = x_nhwc.shape[0]
    Cout, Cin = w_oihw.shape[:2]
    cin_x = x_nhwc.shape[-1]

    # Fill the 256-wide MXU on v6e/v7x for wide layers; 128 already fills v5e.
    c_mult = 256 if Cout > LANE else LANE
    C_pad = _round_up(Cout, c_mult)

    P, Hout, Wout = _im2col(x_nhwc, stride)              # (M, 9*cin_x) bf16
    M, K = P.shape
    K_pad = _round_up(K, LANE)

    tile_m = _pick_tile_m(M, K_pad, C_pad)
    M_pad = _round_up(M, tile_m * N_PAR)
    tpc = M_pad // tile_m // N_PAR                       # row tiles per parallel core

    # Zero-padded rows/cols contribute exactly 0 to the matmul and the stats.
    P_pad = jnp.pad(P, ((0, M_pad - M), (0, K_pad - K)))
    # (Cout,Cin,3,3) -> (ky,kx,Cin,Cout); pad Cin->cin_x, Cout->C_pad with zeros so it
    # matches the channel-padded patch layout; flatten to (9*cin_x, C_pad); pad K.
    Wm = jnp.transpose(w_oihw, (2, 3, 1, 0))
    Wm = jnp.pad(Wm, ((0, 0), (0, 0), (0, cin_x - Cin), (0, C_pad - Cout)))
    Wm = Wm.reshape(9 * cin_x, C_pad).astype(COMPUTE_DTYPE)
    W_pad = jnp.pad(Wm, ((0, K_pad - K), (0, 0)))

    bytes1 = (M_pad * K_pad + K_pad * C_pad + M_pad * C_pad) * 2 \
        + 2 * N_PAR * 8 * C_pad * 4
    y, s, sq = pl.pallas_call(
        _conv_stats_kernel,
        grid=(N_PAR, tpc),
        in_specs=[
            pl.BlockSpec((tile_m, K_pad), lambda i, j: (i * tpc + j, 0)),
            pl.BlockSpec((K_pad, C_pad), lambda i, j: (0, 0)),
        ],
        out_specs=(
            pl.BlockSpec((tile_m, C_pad), lambda i, j: (i * tpc + j, 0)),
            pl.BlockSpec((8, C_pad), lambda i, j: (i, 0)),
            pl.BlockSpec((8, C_pad), lambda i, j: (i, 0)),
        ),
        out_shape=(
            jax.ShapeDtypeStruct((M_pad, C_pad), COMPUTE_DTYPE),
            jax.ShapeDtypeStruct((N_PAR * 8, C_pad), jnp.float32),
            jax.ShapeDtypeStruct((N_PAR * 8, C_pad), jnp.float32),
        ),
        compiler_params=pltpu.CompilerParams(
            dimension_semantics=("parallel", "arbitrary"),
            vmem_limit_bytes=VMEM_LIMIT),
        cost_estimate=pl.CostEstimate(
            flops=2 * M_pad * K_pad * C_pad, transcendentals=0,
            bytes_accessed=bytes1),
    )(P_pad, W_pad)

    # Tiny (C_pad,)-sized fp32 glue: collapse per-core 8-row partial sums, compute
    # biased batch stats exactly like PyTorch BatchNorm2d in training mode, fold into
    # a per-channel scale/shift.  Padded channels get scale=0, shift=0 -> stay zero.
    cnt = jnp.float32(M)
    s1 = jnp.sum(s, axis=0)
    sq1 = jnp.sum(sq, axis=0)
    mean = s1 / cnt
    # TODO(synk): switch to shifted/Welford accumulation if |mean| >> std matters.
    var = jnp.maximum(sq1 / cnt - mean * mean, 0.0)      # clamp fp cancellation
    inv_std = lax.rsqrt(var + BN_EPS)
    g_pad = jnp.pad(gamma.astype(jnp.float32), (0, C_pad - Cout))
    b_pad = jnp.pad(beta.astype(jnp.float32), (0, C_pad - Cout))
    scale = (g_pad * inv_std).reshape(1, C_pad)
    shift = (b_pad - mean * g_pad * inv_std).reshape(1, C_pad)

    # Pass 2: big row tiles (divisor of the total tile count, capped by PASS2_TILE_M).
    total = M_pad // tile_m
    k2 = 1
    for cand in range(1, total + 1):
        if total % cand == 0 and cand * tile_m <= PASS2_TILE_M:
            k2 = cand
    tile2 = tile_m * k2
    n2 = total // k2

    bytes2 = 2 * M_pad * C_pad * 2 + 2 * C_pad * 4
    out = pl.pallas_call(
        _bn_relu_kernel,
        grid=(n2,),
        in_specs=[
            pl.BlockSpec((tile2, C_pad), lambda i: (i, 0)),
            pl.BlockSpec((1, C_pad), lambda i: (0, 0)),
            pl.BlockSpec((1, C_pad), lambda i: (0, 0)),
        ],
        out_specs=pl.BlockSpec((tile2, C_pad), lambda i: (i, 0)),
        out_shape=jax.ShapeDtypeStruct((M_pad, C_pad), COMPUTE_DTYPE),
        compiler_params=pltpu.CompilerParams(
            dimension_semantics=("parallel",),
            vmem_limit_bytes=VMEM_LIMIT),
        cost_estimate=pl.CostEstimate(
            flops=2 * M_pad * C_pad, transcendentals=0, bytes_accessed=bytes2),
    )(y, scale, shift)

    # Drop padded tail rows (they hold relu(shift), not real data); keep channel pad.
    return out[:M].reshape(N, Hout, Wout, C_pad)


@jax.jit
def downsample_step(x_nchw, params):
    """DownsapleStep forward. x_nchw: (N,Cin,H,W) -> (N,Cout,H//2,W//2) fp32."""
    x = jnp.transpose(x_nchw, (0, 2, 3, 1))  # NCHW -> NHWC
    for blk, s in zip(params, (2, 1, 1)):
        # conv bias blk["b"] intentionally unused: bias before train-mode BN is a no-op.
        x = _conv_bn_relu_block(x, blk["w"], blk["gamma"], blk["beta"], s)
    Cout = params[-1]["w"].shape[0]
    x = x[..., :Cout].astype(jnp.float32)    # single channel un-pad at the very end
    return jnp.transpose(x, (0, 3, 1, 2))    # NHWC -> NCHW


# --- pure-JAX fp32 reference (mirrors PyTorch training-mode forward) ---------
def _ref_block(x_nchw, w, b, g, beta, stride):
    y = lax.conv_general_dilated(
        x_nchw, w, (stride, stride), [(1, 1), (1, 1)],
        dimension_numbers=("NCHW", "OIHW", "NCHW"))
    y = y + b[None, :, None, None]
    mean = y.mean(axis=(0, 2, 3), keepdims=True)
    var = ((y - mean) ** 2).mean(axis=(0, 2, 3), keepdims=True)
    y = (y - mean) * lax.rsqrt(var + BN_EPS) * g[None, :, None, None] \
        + beta[None, :, None, None]
    return jnp.maximum(y, 0.0)


def _ref_downsample(x_nchw, params):
    x = x_nchw
    for blk, s in zip(params, (2, 1, 1)):
        x = _ref_block(x, blk["w"], blk["b"], blk["gamma"], blk["beta"], s)
    return x


def make_params(key, in_channels, out_channels):
    params = []
    chans = [(in_channels, out_channels), (out_channels, out_channels),
             (out_channels, out_channels)]
    for i, (cin, cout) in enumerate(chans):
        k_w, k_b = jax.random.split(jax.random.fold_in(key, i))
        params.append({
            "w": 0.1 * jax.random.normal(k_w, (cout, cin, 3, 3), jnp.float32),
            "b": 0.05 * jax.random.normal(k_b, (cout,), jnp.float32),
            "gamma": jnp.ones((cout,), jnp.float32),   # BatchNorm2d default init
            "beta": jnp.zeros((cout,), jnp.float32),
        })
    return params


if __name__ == "__main__":
    key = jax.random.PRNGKey(0)
    k_x, k_p = jax.random.split(key)

    N, Cin, Cout, H, W = 2, 4, 8, 16, 16
    x = jax.random.normal(k_x, (N, Cin, H, W), jnp.float32)
    params = make_params(k_p, Cin, Cout)

    out = jax.block_until_ready(downsample_step(x, params))
    assert out.shape == (N, Cout, H // 2, W // 2), out.shape

    ref = jax.block_until_ready(_ref_downsample(x, params))
    # bf16 MXU operands AND bf16 inter-pass / inter-block activations across three
    # conv+BN blocks -> allow bf16-level tolerance vs. the fp32 reference.
    err = float(jnp.max(jnp.abs(out - ref)))
    assert jnp.allclose(out, ref, atol=1e-1, rtol=1e-1), err

    print("KERNEL_OK")
</pallas_src>

<mosaic_0001>
module attributes {stable_mosaic.version = 11 : i64} {
  func.func @_conv_stats_kernel(%arg0: i32, %arg1: i32, %arg2: memref<64x128xbf16, #tpu.memory_space<vmem>>, %arg3: memref<128x128xbf16, #tpu.memory_space<vmem>>, %arg4: memref<64x128xbf16, #tpu.memory_space<vmem>>, %arg5: memref<8x128xf32, #tpu.memory_space<vmem>>, %arg6: memref<8x128xf32, #tpu.memory_space<vmem>>) attributes {dimension_semantics = [#tpu.dimension_semantics<parallel>, #tpu.dimension_semantics<arbitrary>], iteration_bounds = array<i64: 2, 1>, scalar_prefetch = 0 : i64, scratch_operands = 0 : i64, tpu.core_type = #tpu.core_type<tc>, window_params = [{transform_indices = @transform_0, window_bounds = array<i64: 64, 128>}, {pipeline_mode = #tpu.pipeline_mode<synchronous>, transform_indices = @transform_1, window_bounds = array<i64: 128, 128>}, {transform_indices = @transform_2, window_bounds = array<i64: 64, 128>}, {transform_indices = @transform_3, window_bounds = array<i64: 8, 128>}, {transform_indices = @transform_4, window_bounds = array<i64: 8, 128>}]} {
    %c0 = arith.constant 0 : index
    %c0_0 = arith.constant 0 : index
    %0 = vector.load %arg2[%c0, %c0_0] : memref<64x128xbf16, #tpu.memory_space<vmem>>, vector<64x128xbf16>
    %c0_1 = arith.constant 0 : index
    %c0_2 = arith.constant 0 : index
    %1 = vector.load %arg3[%c0_1, %c0_2] : memref<128x128xbf16, #tpu.memory_space<vmem>>, vector<128x128xbf16>
    %cst = arith.constant dense<0.000000e+00> : vector<64x128xf32>
    %2 = tpu.matmul %0, %1, %cst {dimension_numbers = #tpu.dot_dimension_numbers<[1], [0], [0], [1], [0, 0, 1, 1], [], []>} : vector<64x128xbf16>, vector<128x128xbf16>, vector<64x128xf32> -> vector<64x128xf32>
    %3 = arith.truncf %2 : vector<64x128xf32> to vector<64x128xbf16>
    %c0_3 = arith.constant 0 : index
    %c0_4 = arith.constant 0 : index
    %4 = vector.load %arg4[%c0_3, %c0_4] : memref<64x128xbf16, #tpu.memory_space<vmem>>, vector<64x128xbf16>
    tpu.vector_store %arg4[%c0_3, %c0_4], %3 {strides = array<i32>} : memref<64x128xbf16, #tpu.memory_space<vmem>>, vector<64x128xbf16>,
    %c0_i32 = arith.constant 0 : i32
    %5 = arith.cmpi eq, %arg1, %c0_i32 : i32
    %6 = arith.extui %5 : i1 to i32
    %c0_i32_5 = arith.constant 0 : i32
    %7 = arith.cmpi ne, %6, %c0_i32_5 : i32
    scf.if %7 {
      %cst_16 = arith.constant 0.000000e+00 : f32
      %18 = vector.broadcast %cst_16 : f32 to vector<8x128xf32>
      %c0_17 = arith.constant 0 : index
      %c0_18 = arith.constant 0 : index
      %19 = vector.load %arg5[%c0_17, %c0_18] : memref<8x128xf32, #tpu.memory_space<vmem>>, vector<8x128xf32>
      tpu.vector_store %arg5[%c0_17, %c0_18], %18 {strides = array<i32>} : memref<8x128xf32, #tpu.memory_space<vmem>>, vector<8x128xf32>,
      %cst_19 = arith.constant 0.000000e+00 : f32
      %20 = vector.broadcast %cst_19 : f32 to vector<8x128xf32>
      %c0_20 = arith.constant 0 : index
      %c0_21 = arith.constant 0 : index
      %21 = vector.load %arg6[%c0_20, %c0_21] : memref<8x128xf32, #tpu.memory_space<vmem>>, vector<8x128xf32>
      tpu.vector_store %arg6[%c0_20, %c0_21], %20 {strides = array<i32>} : memref<8x128xf32, #tpu.memory_space<vmem>>, vector<8x128xf32>,
    } else {
    }
    %8 = vector.shape_cast %2 : vector<64x128xf32> to vector<8x8x128xf32>
    %c0_6 = arith.constant 0 : index
    %c0_7 = arith.constant 0 : index
    %9 = vector.load %arg5[%c0_6, %c0_7] : memref<8x128xf32, #tpu.memory_space<vmem>>, vector<8x128xf32>
    %cst_8 = arith.constant dense<0.000000e+00> : vector<8x128xf32>
    %10 = vector.multi_reduction <add>, %8, %cst_8 [0] : vector<8x8x128xf32> to vector<8x128xf32>
    %11 = arith.addf %9, %10 : vector<8x128xf32>
    %c0_9 = arith.constant 0 : index
    %c0_10 = arith.constant 0 : index
    %12 = vector.load %arg5[%c0_9, %c0_10] : memref<8x128xf32, #tpu.memory_space<vmem>>, vector<8x128xf32>
    tpu.vector_store %arg5[%c0_9, %c0_10], %11 {strides = array<i32>} : memref<8x128xf32, #tpu.memory_space<vmem>>, vector<8x128xf32>,
    %c0_11 = arith.constant 0 : index
    %c0_12 = arith.constant 0 : index
    %13 = vector.load %arg6[%c0_11, %c0_12] : memref<8x128xf32, #tpu.memory_space<vmem>>, vector<8x128xf32>
    %14 = arith.mulf %8, %8 : vector<8x8x128xf32>
    %cst_13 = arith.constant dense<0.000000e+00> : vector<8x128xf32>
    %15 = vector.multi_reduction <add>, %14, %cst_13 [0] : vector<8x8x128xf32> to vector<8x128xf32>
    %16 = arith.addf %13, %15 : vector<8x128xf32>
    %c0_14 = arith.constant 0 : index
    %c0_15 = arith.constant 0 : index
    %17 = vector.load %arg6[%c0_14, %c0_15] : memref<8x128xf32, #tpu.memory_space<vmem>>, vector<8x128xf32>
    tpu.vector_store %arg6[%c0_14, %c0_15], %16 {strides = array<i32>} : memref<8x128xf32, #tpu.memory_space<vmem>>, vector<8x128xf32>,
    return
  }
  func.func @transform_0(%arg0: i32, %arg1: i32) -> (i32, i32) {
    %c1_i32 = arith.constant 1 : i32
    %0 = arith.muli %arg0, %c1_i32 : i32
    %1 = arith.addi %0, %arg1 : i32
    %c0_i32 = arith.constant 0 : i32
    %c0_i32_0 = arith.constant 0 : i32
    return %1, %c0_i32 : i32, i32
  }
  func.func @transform_1(%arg0: i32, %arg1: i32) -> (i32, i32) {
    %c0_i32 = arith.constant 0 : i32
    %c0_i32_0 = arith.constant 0 : i32
    %c0_i32_1 = arith.constant 0 : i32
    return %c0_i32, %c0_i32_0 : i32, i32
  }
  func.func @transform_2(%arg0: i32, %arg1: i32) -> (i32, i32) {
    %c1_i32 = arith.constant 1 : i32
    %0 = arith.muli %arg0, %c1_i32 : i32
    %1 = arith.addi %0, %arg1 : i32
    %c0_i32 = arith.constant 0 : i32
    %c0_i32_0 = arith.constant 0 : i32
    return %1, %c0_i32 : i32, i32
  }
  func.func @transform_3(%arg0: i32, %arg1: i32) -> (i32, i32) {
    %c0_i32 = arith.constant 0 : i32
    %c0_i32_0 = arith.constant 0 : i32
    return %arg0, %c0_i32 : i32, i32
  }
  func.func @transform_4(%arg0: i32, %arg1: i32) -> (i32, i32) {
    %c0_i32 = arith.constant 0 : i32
    %c0_i32_0 = arith.constant 0 : i32
    return %arg0, %c0_i32 : i32, i32
  }
}

module attributes {stable_mosaic.version = 11 : i64} {
  func.func @_bn_relu_kernel(%arg0: i32, %arg1: memref<128x128xbf16, #tpu.memory_space<vmem>>, %arg2: memref<1x128xf32, #tpu.memory_space<vmem>>, %arg3: memref<1x128xf32, #tpu.memory_space<vmem>>, %arg4: memref<128x128xbf16, #tpu.memory_space<vmem>>) attributes {dimension_semantics = [#tpu.dimension_semantics<parallel>], iteration_bounds = array<i64: 1>, scalar_prefetch = 0 : i64, scratch_operands = 0 : i64, tpu.core_type = #tpu.core_type<tc>, window_params = [{transform_indices = @transform_0, window_bounds = array<i64: 128, 128>}, {pipeline_mode = #tpu.pipeline_mode<synchronous>, transform_indices = @transform_1, window_bounds = array<i64: 1, 128>}, {pipeline_mode = #tpu.pipeline_mode<synchronous>, transform_indices = @transform_2, window_bounds = array<i64: 1, 128>}, {transform_indices = @transform_3, window_bounds = array<i64: 128, 128>}]} {
    %c0 = arith.constant 0 : index
    %c0_0 = arith.constant 0 : index
    %0 = vector.load %arg1[%c0, %c0_0] : memref<128x128xbf16, #tpu.memory_space<vmem>>, vector<128x128xbf16>
    %1 = arith.extf %0 : vector<128x128xbf16> to vector<128x128xf32>
    %c0_1 = arith.constant 0 : index
    %c0_2 = arith.constant 0 : index
    %2 = vector.load %arg2[%c0_1, %c0_2] : memref<1x128xf32, #tpu.memory_space<vmem>>, vector<1x128xf32>
    %3 = vector.broadcast %2 : vector<1x128xf32> to vector<128x128xf32>
    %4 = arith.mulf %1, %3 : vector<128x128xf32>
    %c0_3 = arith.constant 0 : index
    %c0_4 = arith.constant 0 : index
    %5 = vector.load %arg3[%c0_3, %c0_4] : memref<1x128xf32, #tpu.memory_space<vmem>>, vector<1x128xf32>
    %6 = vector.broadcast %5 : vector<1x128xf32> to vector<128x128xf32>
    %7 = arith.addf %4, %6 : vector<128x128xf32>
    %cst = arith.constant 0.000000e+00 : f32
    %8 = vector.broadcast %cst : f32 to vector<128x128xf32>
    %9 = arith.maximumf %7, %8 : vector<128x128xf32>
    %10 = arith.truncf %9 : vector<128x128xf32> to vector<128x128xbf16>
    %c0_5 = arith.constant 0 : index
    %c0_6 = arith.constant 0 : index
    %11 = vector.load %arg4[%c0_5, %c0_6] : memref<128x128xbf16, #tpu.memory_space<vmem>>, vector<128x128xbf16>
    tpu.vector_store %arg4[%c0_5, %c0_6], %10 {strides = array<i32>} : memref<128x128xbf16, #tpu.memory_space<vmem>>, vector<128x128xbf16>,
    return
  }
  func.func @transform_0(%arg0: i32) -> (i32, i32) {
    %c0_i32 = arith.constant 0 : i32
    %c0_i32_0 = arith.constant 0 : i32
    return %arg0, %c0_i32 : i32, i32
  }
  func.func @transform_1(%arg0: i32) -> (i32, i32) {
    %c0_i32 = arith.constant 0 : i32
    %c0_i32_0 = arith.constant 0 : i32
    %c0_i32_1 = arith.constant 0 : i32
    return %c0_i32, %c0_i32_0 : i32, i32
  }
  func.func @transform_2(%arg0: i32) -> (i32, i32) {
    %c0_i32 = arith.constant 0 : i32
    %c0_i32_0 = arith.constant 0 : i32
    %c0_i32_1 = arith.constant 0 : i32
    return %c0_i32, %c0_i32_0 : i32, i32
  }
  func.func @transform_3(%arg0: i32) -> (i32, i32) {
    %c0_i32 = arith.constant 0 : i32
    %c0_i32_0 = arith.constant 0 : i32
    return %arg0, %c0_i32 : i32, i32
  }
}

module attributes {stable_mosaic.version = 11 : i64} {
  func.func @_conv_stats_kernel(%arg0: i32, %arg1: i32, %arg2: memref<64x1152xbf16, #tpu.memory_space<vmem>>, %arg3: memref<1152x128xbf16, #tpu.memory_space<vmem>>, %arg4: memref<64x128xbf16, #tpu.memory_space<vmem>>, %arg5: memref<8x128xf32, #tpu.memory_space<vmem>>, %arg6: memref<8x128xf32, #tpu.memory_space<vmem>>) attributes {dimension_semantics = [#tpu.dimension_semantics<parallel>, #tpu.dimension_semantics<arbitrary>], iteration_bounds = array<i64: 2, 1>, scalar_prefetch = 0 : i64, scratch_operands = 0 : i64, tpu.core_type = #tpu.core_type<tc>, window_params = [{transform_indices = @transform_0, window_bounds = array<i64: 64, 1152>}, {pipeline_mode = #tpu.pipeline_mode<synchronous>, transform_indices = @transform_1, window_bounds = array<i64: 1152, 128>}, {transform_indices = @transform_2, window_bounds = array<i64: 64, 128>}, {transform_indices = @transform_3, window_bounds = array<i64: 8, 128>}, {transform_indices = @transform_4, window_bounds = array<i64: 8, 128>}]} {
    %c0 = arith.constant 0 : index
    %c0_0 = arith.constant 0 : index
    %0 = vector.load %arg2[%c0, %c0_0] : memref<64x1152xbf16, #tpu.memory_space<vmem>>, vector<64x1152xbf16>
    %c0_1 = arith.constant 0 : index
    %c0_2 = arith.constant 0 : index
    %1 = vector.load %arg3[%c0_1, %c0_2] : memref<1152x128xbf16, #tpu.memory_space<vmem>>, vector<1152x128xbf16>
    %cst = arith.constant dense<0.000000e+00> : vector<64x128xf32>
    %2 = tpu.matmul %0, %1, %cst {dimension_numbers = #tpu.dot_dimension_numbers<[1], [0], [0], [1], [0, 0, 1, 1], [], []>} : vector<64x1152xbf16>, vector<1152x128xbf16>, vector<64x128xf32> -> vector<64x128xf32>
    %3 = arith.truncf %2 : vector<64x128xf32> to vector<64x128xbf16>
    %c0_3 = arith.constant 0 : index
    %c0_4 = arith.constant 0 : index
    %4 = vector.load %arg4[%c0_3, %c0_4] : memref<64x128xbf16, #tpu.memory_space<vmem>>, vector<64x128xbf16>
    tpu.vector_store %arg4[%c0_3, %c0_4], %3 {strides = array<i32>} : memref<64x128xbf16, #tpu.memory_space<vmem>>, vector<64x128xbf16>,
    %c0_i32 = arith.constant 0 : i32
    %5 = arith.cmpi eq, %arg1, %c0_i32 : i32
    %6 = arith.extui %5 : i1 to i32
    %c0_i32_5 = arith.constant 0 : i32
    %7 = arith.cmpi ne, %6, %c0_i32_5 : i32
    scf.if %7 {
      %cst_16 = arith.constant 0.000000e+00 : f32
      %18 = vector.broadcast %cst_16 : f32 to vector<8x128xf32>
      %c0_17 = arith.constant 0 : index
      %c0_18 = arith.constant 0 : index
      %19 = vector.load %arg5[%c0_17, %c0_18] : memref<8x128xf32, #tpu.memory_space<vmem>>, vector<8x128xf32>
      tpu.vector_store %arg5[%c0_17, %c0_18], %18 {strides = array<i32>} : memref<8x128xf32, #tpu.memory_space<vmem>>, vector<8x128xf32>,
      %cst_19 = arith.constant 0.000000e+00 : f32
      %20 = vector.broadcast %cst_19 : f32 to vector<8x128xf32>
      %c0_20 = arith.constant 0 : index
      %c0_21 = arith.constant 0 : index
      %21 = vector.load %arg6[%c0_20, %c0_21] : memref<8x128xf32, #tpu.memory_space<vmem>>, vector<8x128xf32>
      tpu.vector_store %arg6[%c0_20, %c0_21], %20 {strides = array<i32>} : memref<8x128xf32, #tpu.memory_space<vmem>>, vector<8x128xf32>,
    } else {
    }
    %8 = vector.shape_cast %2 : vector<64x128xf32> to vector<8x8x128xf32>
    %c0_6 = arith.constant 0 : index
    %c0_7 = arith.constant 0 : index
    %9 = vector.load %arg5[%c0_6, %c0_7] : memref<8x128xf32, #tpu.memory_space<vmem>>, vector<8x128xf32>
    %cst_8 = arith.constant dense<0.000000e+00> : vector<8x128xf32>
    %10 = vector.multi_reduction <add>, %8, %cst_8 [0] : vector<8x8x128xf32> to vector<8x128xf32>
    %11 = arith.addf %9, %10 : vector<8x128xf32>
    %c0_9 = arith.constant 0 : index
    %c0_10 = arith.constant 0 : index
    %12 = vector.load %arg5[%c0_9, %c0_10] : memref<8x128xf32, #tpu.memory_space<vmem>>, vector<8x128xf32>
    tpu.vector_store %arg5[%c0_9, %c0_10], %11 {strides = array<i32>} : memref<8x128xf32, #tpu.memory_space<vmem>>, vector<8x128xf32>,
    %c0_11 = arith.constant 0 : index
    %c0_12 = arith.constant 0 : index
    %13 = vector.load %arg6[%c0_11, %c0_12] : memref<8x128xf32, #tpu.memory_space<vmem>>, vector<8x128xf32>
    %14 = arith.mulf %8, %8 : vector<8x8x128xf32>
    %cst_13 = arith.constant dense<0.000000e+00> : vector<8x128xf32>
    %15 = vector.multi_reduction <add>, %14, %cst_13 [0] : vector<8x8x128xf32> to vector<8x128xf32>
    %16 = arith.addf %13, %15 : vector<8x128xf32>
    %c0_14 = arith.constant 0 : index
    %c0_15 = arith.constant 0 : index
    %17 = vector.load %arg6[%c0_14, %c0_15] : memref<8x128xf32, #tpu.memory_space<vmem>>, vector<8x128xf32>
    tpu.vector_store %arg6[%c0_14, %c0_15], %16 {strides = array<i32>} : memref<8x128xf32, #tpu.memory_space<vmem>>, vector<8x128xf32>,
    return
  }
  func.func @transform_0(%arg0: i32, %arg1: i32) -> (i32, i32) {
    %c1_i32 = arith.constant 1 : i32
    %0 = arith.muli %arg0, %c1_i32 : i32
    %1 = arith.addi %0, %arg1 : i32
    %c0_i32 = arith.constant 0 : i32
    %c0_i32_0 = arith.constant 0 : i32
    return %1, %c0_i32 : i32, i32
  }
  func.func @transform_1(%arg0: i32, %arg1: i32) -> (i32, i32) {
    %c0_i32 = arith.constant 0 : i32
    %c0_i32_0 = arith.constant 0 : i32
    %c0_i32_1 = arith.constant 0 : i32
    return %c0_i32, %c0_i32_0 : i32, i32
  }
  func.func @transform_2(%arg0: i32, %arg1: i32) -> (i32, i32) {
    %c1_i32 = arith.constant 1 : i32
    %0 = arith.muli %arg0, %c1_i32 : i32
    %1 = arith.addi %0, %arg1 : i32
    %c0_i32 = arith.constant 0 : i32
    %c0_i32_0 = arith.constant 0 : i32
    return %1, %c0_i32 : i32, i32
  }
  func.func @transform_3(%arg0: i32, %arg1: i32) -> (i32, i32) {
    %c0_i32 = arith.constant 0 : i32
    %c0_i32_0 = arith.constant 0 : i32
    return %arg0, %c0_i32 : i32, i32
  }
  func.func @transform_4(%arg0: i32, %arg1: i32) -> (i32, i32) {
    %c0_i32 = arith.constant 0 : i32
    %c0_i32_0 = arith.constant 0 : i32
    return %arg0, %c0_i32 : i32, i32
  }
}

</mosaic_0001>

<llo_original>
// kernel: downsample_step.7
$region0: #{downsample_step.7}
  #allocation0 [shape = 'u32[]', space=smem, size = 0x4, offset = 0x4, fixed_abs, tag = 'smem constant byte address 0x4 - core index']
  #allocation1 [shape = 'u32[144,128]{1,0:T(1,128)}', space=vmem, size = 0x12000, scoped, tag = 'internal scratch']
  %s0 = inlined_call_operand.vmem [shape: bf16[128,128], index: 0, kind: input, shape index: {}]
  %s1 = inlined_call_operand.vmem [shape: f32[1,128], index: 1, kind: input, shape index: {}]
  %s2 = inlined_call_operand.vmem [shape: f32[1,128], index: 2, kind: input, shape index: {}]
  %s3 = inlined_call_operand.vmem [shape: bf16[128,128], index: 3, kind: output, shape index: {}]
  %s4 = sld [smem:[#allocation0]]
  $region22: #{downsample_step.7} parent=0
    _
  %s6 = ssub.s32 1, %s4
  %s7 = scalar_select 0, %s6, %s4
  // Predicated region
  $region2: #{downsample_step.7} parent=0 // pred_check
    _
  $region3: #{downsample_step.7} parent=0 // pred_check_branch
    %9 = sbr.rel (0) target = $region5
  $region4: #{downsample_step.7} parent=0 // pred_region
    _
  $region5: #{downsample_step.7} parent=0 // pred_fallthru
    _
  // Predicated region
  $region6: #{downsample_step.7} parent=0 // pred_check
    _
  $region7: #{downsample_step.7} parent=0 // pred_check_branch
    %11 = sbr.rel (0) target = $region9
  $region8: #{downsample_step.7} parent=0 // pred_region
    _
  $region9: #{downsample_step.7} parent=0 // pred_fallthru
    _
  // Predicated region
  $region10: #{downsample_step.7} parent=0 // pred_check
    _
  $region11: #{downsample_step.7} parent=0 // pred_check_branch
    %13 = sbr.rel (0) target = $region13
  $region12: #{downsample_step.7} parent=0 // pred_region
    _
  $region13: #{downsample_step.7} parent=0 // pred_fallthru
    _
  %v14 = vld [vmem:[%s0] sm:$0xf]
  %v15 = vld [vmem:[%s0 + $0x4] sm:$0xf]
  %v16 = vld [vmem:[%s0 + $0x8] sm:$0xf]
  %v17 = vld [vmem:[%s0 + $0xc] sm:$0xf]
  %v18 = vld [vmem:[%s0 + $0x10] sm:$0xf]
  %v19 = vld [vmem:[%s0 + $0x14] sm:$0xf]
  %v20 = vld [vmem:[%s0 + $0x18] sm:$0xf]
  %v21 = vld [vmem:[%s0 + $0x1c] sm:$0xf]
  %v22 = vld [vmem:[%s0 + $0x20] sm:$0xf]
  %v23 = vld [vmem:[%s0 + $0x24] sm:$0xf]
  %v24 = vld [vmem:[%s0 + $0x28] sm:$0xf]
  %v25 = vld [vmem:[%s0 + $0x2c] sm:$0xf]
  %v26 = vld [vmem:[%s0 + $0x30] sm:$0xf]
  %v27 = vld [vmem:[%s0 + $0x34] sm:$0xf]
  %v28 = vld [vmem:[%s0 + $0x38] sm:$0xf]
  %v29 = vld [vmem:[%s0 + $0x3c] sm:$0xf]
  %v30 = vunpack.c.l.bf16 %v14
  %v31 = vunpack.c.l.bf16 %v15
  %v32 = vunpack.c.l.bf16 %v16
  %v33 = vunpack.c.l.bf16 %v17
  %v34 = vunpack.c.l.bf16 %v18
  %v35 = vunpack.c.l.bf16 %v19
  %v36 = vunpack.c.l.bf16 %v20
  %v37 = vunpack.c.l.bf16 %v21
  %v38 = vunpack.c.l.bf16 %v22
  %v39 = vunpack.c.l.bf16 %v23
  %v40 = vunpack.c.l.bf16 %v24
  %v41 = vunpack.c.l.bf16 %v25
  %v42 = vunpack.c.l.bf16 %v26
  %v43 = vunpack.c.l.bf16 %v27
  %v44 = vunpack.c.l.bf16 %v28
  %v45 = vunpack.c.l.bf16 %v29
  %v46 = vld [vmem:[%s1] sm:$0x1]
  %v48 = vlaneseq
  %v49 = vshrl.u32 %v48, 7
  %v50 = vsub.s32 0, %v49
  %v51 = vrot.slane %v46, %v50
  %v53 = vmul.f32 %v30, %v51
  %v54 = vmul.f32 %v31, %v51
  %v55 = vmul.f32 %v32, %v51
  %v56 = vmul.f32 %v33, %v51
  %v57 = vmul.f32 %v34, %v51
  %v58 = vmul.f32 %v35, %v51
  %v59 = vmul.f32 %v36, %v51
  %v60 = vmul.f32 %v37, %v51
  %v61 = vmul.f32 %v38, %v51
  %v62 = vmul.f32 %v39, %v51
  %v63 = vmul.f32 %v40, %v51
  %v64 = vmul.f32 %v41, %v51
  %v65 = vmul.f32 %v42, %v51
  %v66 = vmul.f32 %v43, %v51
  %v67 = vmul.f32 %v44, %v51
  %v68 = vmul.f32 %v45, %v51
  %v69 = vld [vmem:[%s2] sm:$0x1]
  %v71 = vlaneseq
  %v72 = vshrl.u32 %v71, 7
  %v73 = vsub.s32 0, %v72
  %v74 = vrot.slane %v69, %v73
  %v76 = vadd.f32 %v53, %v74
  %v77 = vadd.f32 %v54, %v74
  %v78 = vadd.f32 %v55, %v74
  %v79 = vadd.f32 %v56, %v74
  %v80 = vadd.f32 %v57, %v74
  %v81 = vadd.f32 %v58, %v74
  %v82 = vadd.f32 %v59, %v74
  %v83 = vadd.f32 %v60, %v74
  %v84 = vadd.f32 %v61, %v74
  %v85 = vadd.f32 %v62, %v74
  %v86 = vadd.f32 %v63, %v74
  %v87 = vadd.f32 %v64, %v74
  %v88 = vadd.f32 %v65, %v74
  %v89 = vadd.f32 %v66, %v74
  %v90 = vadd.f32 %v67, %v74
  %v91 = vadd.f32 %v68, %v74
  %v92 = vmax.f32 %v76, 0.0
  %v93 = vmax.f32 %v77, 0.0
  %v94 = vmax.f32 %v78, 0.0
  %v95 = vmax.f32 %v79, 0.0
  %v96 = vmax.f32 %v80, 0.0
  %v97 = vmax.f32 %v81, 0.0
  %v98 = vmax.f32 %v82, 0.0
  %v99 = vmax.f32 %v83, 0.0
  %v100 = vmax.f32 %v84, 0.0
  %v101 = vmax.f32 %v85, 0.0
  %v102 = vmax.f32 %v86, 0.0
  %v103 = vmax.f32 %v87, 0.0
  %v104 = vmax.f32 %v88, 0.0
  %v105 = vmax.f32 %v89, 0.0
  %v106 = vmax.f32 %v90, 0.0
  %v107 = vmax.f32 %v91, 0.0
  %v108 = vpack.c.bf16 %v93, %v92
  %v109 = vpack.c.bf16 %v95, %v94
  %v110 = vpack.c.bf16 %v97, %v96
  %v111 = vpack.c.bf16 %v99, %v98
  %v112 = vpack.c.bf16 %v101, %v100
  %v113 = vpack.c.bf16 %v103, %v102
  %v114 = vpack.c.bf16 %v105, %v104
  %v115 = vpack.c.bf16 %v107, %v106
  %v124 = vunpack.c.l.b16 %v108
  %v125 = vunpack.c.h.b16 %v108
  %v126 = vunpack.c.l.b16 %v109
  %v127 = vunpack.c.h.b16 %v109
  %v128 = vunpack.c.l.b16 %v110
  %v129 = vunpack.c.h.b16 %v110
  %v130 = vunpack.c.l.b16 %v111
  %v131 = vunpack.c.h.b16 %v111
  %v132 = vunpack.c.l.b16 %v112
  %v133 = vunpack.c.h.b16 %v112
  %v134 = vunpack.c.l.b16 %v113
  %v135 = vunpack.c.h.b16 %v113
  %v136 = vunpack.c.l.b16 %v114
  %v137 = vunpack.c.h.b16 %v114
  %v138 = vunpack.c.l.b16 %v115
  %v139 = vunpack.c.h.b16 %v115
  %v140 = vpack.c.b16 %v124, %v124
  %v141 = vpack.c.b16 %v125, %v125
  %v142 = vpack.c.b16 %v126, %v126
  %v143 = vpack.c.b16 %v127, %v127
  %v144 = vpack.c.b16 %v128, %v128
  %v145 = vpack.c.b16 %v129, %v129
  %v146 = vpack.c.b16 %v130, %v130
  %v147 = vpack.c.b16 %v131, %v131
  %v148 = vpack.c.b16 %v132, %v132
  %v149 = vpack.c.b16 %v133, %v133
  %v150 = vpack.c.b16 %v134, %v134
  %v151 = vpack.c.b16 %v135, %v135
  %v152 = vpack.c.b16 %v136, %v136
  %v153 = vpack.c.b16 %v137, %v137
  %v154 = vpack.c.b16 %v138, %v138
  %v155 = vpack.c.b16 %v139, %v139
  %172 = vst [vmem:[%s3] sm:$0xf] %v140
  %173 = vst [vmem:[%s3 + $0x4] sm:$0xf] %v141
  %174 = vst [vmem:[%s3 + $0x8] sm:$0xf] %v142
  %175 = vst [vmem:[%s3 + $0xc] sm:$0xf] %v143
  %176 = vst [vmem:[%s3 + $0x10] sm:$0xf] %v144
  %177 = vst [vmem:[%s3 + $0x14] sm:$0xf] %v145
  %178 = vst [vmem:[%s3 + $0x18] sm:$0xf] %v146
  %179 = vst [vmem:[%s3 + $0x1c] sm:$0xf] %v147
  %180 = vst [vmem:[%s3 + $0x20] sm:$0xf] %v148
  %181 = vst [vmem:[%s3 + $0x24] sm:$0xf] %v149
  %182 = vst [vmem:[%s3 + $0x28] sm:$0xf] %v150
  %183 = vst [vmem:[%s3 + $0x2c] sm:$0xf] %v151
  %184 = vst [vmem:[%s3 + $0x30] sm:$0xf] %v152
  %185 = vst [vmem:[%s3 + $0x34] sm:$0xf] %v153
  %186 = vst [vmem:[%s3 + $0x38] sm:$0xf] %v154
  %187 = vst [vmem:[%s3 + $0x3c] sm:$0xf] %v155
  // Predicated region
  $region14: #{downsample_step.7} parent=0 // pred_check
    _
  $region15: #{downsample_step.7} parent=0 // pred_check_branch
    %189 = sbr.rel (0) target = $region17
  $region16: #{downsample_step.7} parent=0 // pred_region
    _
  $region17: #{downsample_step.7} parent=0 // pred_fallthru
    _
  // Predicated region
  $region18: #{downsample_step.7} parent=0 // pred_check
    _
  $region19: #{downsample_step.7} parent=0 // pred_check_branch
    %191 = sbr.rel (0) target = $region21
  $region20: #{downsample_step.7} parent=0 // pred_region
    _
  $region21: #{downsample_step.7} parent=0 // pred_fallthru
    _

// kernel: downsample_step.6
$region0: #{downsample_step.6}
  #allocation0 [shape = 'u32[]', space=smem, size = 0x4, offset = 0x4, fixed_abs, tag = 'smem constant byte address 0x4 - core index']
  #allocation1 [shape = 'u32[144,128]{1,0:T(1,128)}', space=vmem, size = 0x12000, scoped, tag = 'internal scratch']
  %s0 = inlined_call_operand.vmem [shape: bf16[128,128], index: 0, kind: input, shape index: {}]
  %s1 = inlined_call_operand.vmem [shape: bf16[128,128], index: 1, kind: input, shape index: {}]
  %s2 = inlined_call_operand.vmem [shape: bf16[128,128], index: 2, kind: output, shape index: {0}]
  %s3 = inlined_call_operand.vmem [shape: f32[16,128], index: 3, kind: output, shape index: {1}]
  %s4 = inlined_call_operand.vmem [shape: f32[16,128], index: 4, kind: output, shape index: {2}]
  %5 = xla_tuple %s2, %s3, %s4
  %s6 = sld [smem:[#allocation0]]
  $region61: #{downsample_step.6} parent=0
    _
  %s8 = ssub.s32 1, %s6
  %s9 = scalar_select 0, %s8, %s6
  loop: start=0, step=1, limit=4
  $region2: #{downsample_step.6} parent=0 // loop_pre_header
    _
  $region3: #{downsample_step.6} parent=0 // loop_header
    %s11 = sphi 0, %s15
    %p12 = scmp.ge.s32.totalorder %s11, 4
    %s18 = sphi 0, %s30
    %s19 = sphi 0, %s26
    %s20 = sphi 0, %s18
    %s21 = sphi 0, %s19
    %s22 = sphi 0, %s20
    %s23 = sphi 0, %s21
    %s35 = sphi 0, %s37
    %s38 = sphi 0, %s35
    %s39 = sphi 0, %s38
    %s55 = sphi 0, %s39
    %s59 = sphi 0, %s59
    %s61 = sphi 0, %s59
    %s62 = sphi 0, %s61
    %s76 = sphi 0, %s62
    %s84 = sphi 0, %s86
    %s87 = sphi 0, %s84
    %s88 = sphi 0, %s87
    %s104 = sphi 0, %s88
    %s110 = sphi 0, %s112
    %s113 = sphi 0, %s110
    %s114 = sphi 0, %s113
    %s130 = sphi 0, %s114
    %s136 = sphi 0, %s138
    %s139 = sphi 0, %s136
    %s140 = sphi 0, %s139
    %s156 = sphi 0, %s140
  $region4: #{downsample_step.6} parent=0 // loop_header_branch
    %14 = sbr.rel (%p12) target = $region8
  $region5: #{downsample_step.6} parent=0 // loop_body
    %s16 = ssub.s32 %s11, 1
    %s17 = ssub.s32 %s11, 2
    %s24 = sadd.s32 1, %s19
    %p25 = scmp.ge.s32.totalorder %s24, 1
    %s26 = scalar_select %p25, 0, %s24
    %s27 = sadd.s32 1, %s18
    %s28 = scalar_select %p25, %s27, %s18
    %p29 = scmp.ge.s32.totalorder %s28, 2
    %s30 = scalar_select %p29, 0, %s28
    %s31 = sadd.s32 %s18, %s19
    %s32 = sadd.s32 %s30, %s26
    %s33 = ssub.s32 %s31, %s32
    %p34 = scmp.eq.s32.totalorder %s33, 0
    %s36 = sadd.s32 %s35, 1
    %s37 = scalar_select %p34, %s35, %s36
    %p40 = pneg %p34
    %p41 = scmp.eq.s32.totalorder %s11, 1
    %p42 = por %p40, %p41
    %p43 = scmp.ne.s32.totalorder %s35, %s38
    %p44 = scmp.eq.s32.totalorder %s11, 0
    %p45 = por %p43, %p44
    %p46 = scmp.ne.s32.totalorder %s35, %s38
    %p47 = scmp.eq.s32.totalorder %s16, 1
    %p48 = por %p46, %p47
    %p49 = scmp.ne.s32.totalorder %s38, %s39
    %p50 = scmp.eq.s32.totalorder %s16, 0
    %p51 = por %p49, %p50
    %p52 = scmp.ne.s32.totalorder %s38, %s39
    %p53 = scmp.eq.s32.totalorder %s17, 1
    %p54 = por %p52, %p53
    %p56 = scmp.ne.s32.totalorder %s39, %s55
    %p57 = scmp.eq.s32.totalorder %s17, 0
    %p58 = por %p56, %p57
    %s60 = sadd.s32 %s59, 1
    %p63 = scmp.eq.s32.totalorder %s11, 1
    %p64 = scmp.ne.s32.totalorder %s59, %s61
    %p65 = scmp.eq.s32.totalorder %s11, 0
    %p66 = por %p64, %p65
    %p67 = scmp.ne.s32.totalorder %s59, %s61
    %p68 = scmp.eq.s32.totalorder %s16, 1
    %p69 = por %p67, %p68
    %p70 = scmp.ne.s32.totalorder %s61, %s62
    %p71 = scmp.eq.s32.totalorder %s16, 0
    %p72 = por %p70, %p71
    %p73 = scmp.ne.s32.totalorder %s61, %s62
    %p74 = scmp.eq.s32.totalorder %s17, 1
    %p75 = por %p73, %p74
    %p77 = scmp.ne.s32.totalorder %s62, %s76
    %p78 = scmp.eq.s32.totalorder %s17, 0
    %p79 = por %p77, %p78
    %s80 = sadd.s32 %s18, %s19
    %s81 = sadd.s32 %s30, %s26
    %s82 = ssub.s32 %s80, %s81
    %p83 = scmp.eq.s32.totalorder %s82, 0
    %s85 = sadd.s32 %s84, 1
    %s86 = scalar_select %p83, %s84, %s85
    %p89 = pneg %p83
    %p90 = scmp.eq.s32.totalorder %s11, 1
    %p91 = por %p89, %p90
    %p92 = scmp.ne.s32.totalorder %s84, %s87
    %p93 = scmp.eq.s32.totalorder %s11, 0
    %p94 = por %p92, %p93
    %p95 = scmp.ne.s32.totalorder %s84, %s87
    %p96 = scmp.eq.s32.totalorder %s16, 1
    %p97 = por %p95, %p96
    %p98 = scmp.ne.s32.totalorder %s87, %s88
    %p99 = scmp.eq.s32.totalorder %s16, 0
    %p100 = por %p98, %p99
    %p101 = scmp.ne.s32.totalorder %s87, %s88
    %p102 = scmp.eq.s32.totalorder %s17, 1
    %p103 = por %p101, %p102
    %p105 = scmp.ne.s32.totalorder %s88, %s104
    %p106 = scmp.eq.s32.totalorder %s17, 0
    %p107 = por %p105, %p106
    %s108 = ssub.s32 %s18, %s30
    %p109 = scmp.eq.s32.totalorder %s108, 0
    %s111 = sadd.s32 %s110, 1
    %s112 = scalar_select %p109, %s110, %s111
    %p115 = pneg %p109
    %p116 = scmp.eq.s32.totalorder %s11, 1
    %p117 = por %p115, %p116
    %p118 = scmp.ne.s32.totalorder %s110, %s113
    %p119 = scmp.eq.s32.totalorder %s11, 0
    %p120 = por %p118, %p119
    %p121 = scmp.ne.s32.totalorder %s110, %s113
    %p122 = scmp.eq.s32.totalorder %s16, 1
    %p123 = por %p121, %p122
    %p124 = scmp.ne.s32.totalorder %s113, %s114
    %p125 = scmp.eq.s32.totalorder %s16, 0
    %p126 = por %p124, %p125
    %p127 = scmp.ne.s32.totalorder %s113, %s114
    %p128 = scmp.eq.s32.totalorder %s17, 1
    %p129 = por %p127, %p128
    %p131 = scmp.ne.s32.totalorder %s114, %s130
    %p132 = scmp.eq.s32.totalorder %s17, 0
    %p133 = por %p131, %p132
    %s134 = ssub.s32 %s18, %s30
    %p135 = scmp.eq.s32.totalorder %s134, 0
    %s137 = sadd.s32 %s136, 1
    %s138 = scalar_select %p135, %s136, %s137
    %p141 = pneg %p135
    %p142 = scmp.eq.s32.totalorder %s11, 1
    %p143 = por %p141, %p142
    %p144 = scmp.ne.s32.totalorder %s136, %s139
    %p145 = scmp.eq.s32.totalorder %s11, 0
    %p146 = por %p144, %p145
    %p147 = scmp.ne.s32.totalorder %s136, %s139
    %p148 = scmp.eq.s32.totalorder %s16, 1
    %p149 = por %p147, %p148
    %p150 = scmp.ne.s32.totalorder %s139, %s140
    %p151 = scmp.eq.s32.totalorder %s16, 0
    %p152 = por %p150, %p151
    %p153 = scmp.ne.s32.totalorder %s139, %s140
    %p154 = scmp.eq.s32.totalorder %s17, 1
    %p155 = por %p153, %p154
    %p157 = scmp.ne.s32.totalorder %s140, %s156
    %p158 = scmp.eq.s32.totalorder %s17, 0
    %p159 = por %p157, %p158
    %p160 = scmp.le.s32.totalorder 1, %s11
    %p161 = scmp.lt.s32.totalorder %s11, 3
    %p162 = pnand %p160, %p161
    %p163 = pneg %p162
    // Predicated region
    $region9: #{downsample_step.6} parent=5 // pred_check
      _
    $region10: #{downsample_step.6} parent=5 // pred_check_branch
      %165 = sbr.rel (%p162) target = $region12
    $region11: #{downsample_step.6} parent=5 // pred_region
      %s166 = ssub.s32 %s11, 1
      // Predicated region
      $region13: #{downsample_step.6} parent=11 // pred_check
        %p167 = pneg %p72
      $region14: #{downsample_step.6} parent=11 // pred_check_branch
        %169 = sbr.rel (%p167) target = $region16
      $region15: #{downsample_step.6} parent=11 // pred_region
        _
      $region16: #{downsample_step.6} parent=11 // pred_fallthru
        _
    $region12: #{downsample_step.6} parent=5 // pred_fallthru
      _
    %p170 = scmp.lt.s32.totalorder %s11, 2
    // Predicated region
    $region17: #{downsample_step.6} parent=5 // pred_check
      %p171 = pneg %p170
    $region18: #{downsample_step.6} parent=5 // pred_check_branch
      %173 = sbr.rel (%p171) target = $region20
    $region19: #{downsample_step.6} parent=5 // pred_region
      // Predicated region
      $region21: #{downsample_step.6} parent=19 // pred_check
        %p174 = pneg %p45
      $region22: #{downsample_step.6} parent=19 // pred_check_branch
        %176 = sbr.rel (%p174) target = $region24
      $region23: #{downsample_step.6} parent=19 // pred_region
        %s177 = sadd.s32 %s18, %s19
        %s178 = smul.u32 8, %s177
        %p179 = scmp.lt.s32.totalorder %s178, 15
        %s180 = scalar_select %p179, %s178, 15
        %s181 = smul.addr %s180, 4
        %s182 = scalar_lea.vmem %s0, %s181
        %s183 = sadd.s32 %s18, %s19
        %s184 = smul.u32 8, %s183
      $region24: #{downsample_step.6} parent=19 // pred_fallthru
        _
    $region20: #{downsample_step.6} parent=5 // pred_fallthru
      _
    %p185 = scmp.le.s32.totalorder 1, %s11
    %p186 = scmp.lt.s32.totalorder %s11, 3
    %p187 = pnand %p185, %p186
    %p188 = pneg %p187
    // Predicated region
    $region25: #{downsample_step.6} parent=5 // pred_check
      _
    $region26: #{downsample_step.6} parent=5 // pred_check_branch
      %190 = sbr.rel (%p187) target = $region28
    $region27: #{downsample_step.6} parent=5 // pred_region
      %s191 = ssub.s32 %s11, 1
      %s192 = sadd.s32 %s20, %s21
      %s193 = smul.u32 8, %s192
      %p194 = scmp.lt.s32.totalorder %s193, 15
      %s195 = scalar_select %p194, %s193, 15
      %s196 = smul.addr %s195, 4
      %s197 = scalar_lea.vmem %s0, %s196
      %p198 = pneg %p51
      %p199 = pneg %p48
      %p200 = pneg %p72
      %p201 = pneg %p69
      %p202 = pneg %p100
      %p203 = pneg %p97
      %s204 = sadd.s32 %s20, %s21
      %s205 = smul.u32 8, %s204
      %p206 = scmp.lt.s32.totalorder %s205, 15
      %s207 = scalar_select %p206, %s205, 15
      %s208 = smul.addr %s207, 4
      %s209 = scalar_lea.vmem %s2, %s208
      %p210 = pneg %p126
      %p211 = pneg %p123
      %p212 = scmp.lt.s32.totalorder %s20, 1
      %s213 = scalar_select %p212, %s20, 1
      %s214 = smul.addr %s213, 8
      %s215 = scalar_lea.vmem %s3, %s214
      %p216 = pneg %p152
      %p217 = pneg %p149
      %p218 = scmp.lt.s32.totalorder %s20, 1
      %s219 = scalar_select %p218, %s20, 1
      %s220 = smul.addr %s219, 8
      %s221 = scalar_lea.vmem %s4, %s220
      %s222 = sadd.s32 %s20, %s21
      %s223 = smul.u32 8, %s222
      %p224 = scmp.lt.s32.totalorder %s223, 15
      %s225 = scalar_select %p224, %s223, 15
      %s226 = smul.addr %s225, 4
      %s227 = scalar_lea.vmem %s0, %s226
      %s228 = sadd.s32 %s20, %s21
      %s229 = smul.u32 8, %s228
      %s230 = sadd.s32 %s20, %s21
      %s231 = smul.u32 8, %s230
      %p232 = scmp.lt.s32.totalorder %s231, 15
      %s233 = scalar_select %p232, %s231, 15
      %s234 = smul.addr %s233, 4
      %s235 = scalar_lea.vmem %s2, %s234
      %s236 = sadd.s32 %s20, %s21
      %s237 = smul.u32 8, %s236
      %p238 = scmp.lt.s32.totalorder %s20, 1
      %s239 = scalar_select %p238, %s20, 1
      %s240 = smul.addr %s239, 8
      %s241 = scalar_lea.vmem %s3, %s240
      %p242 = scmp.lt.s32.totalorder %s20, 1
      %s243 = scalar_select %p242, %s20, 1
      %s244 = smul.addr %s243, 8
      %s245 = scalar_lea.vmem %s4, %s244
      %v247 = vld [vmem:[%s227] sm:$0xf]
      %v248 = vld [vmem:[%s227 + $0x4] sm:$0xf]
      %v249 = vld [vmem:[%s227 + $0x8] sm:$0xf]
      %v250 = vld [vmem:[%s227 + $0xc] sm:$0xf]
      %v251 = vld [vmem:[%s227 + $0x10] sm:$0xf]
      %v252 = vld [vmem:[%s227 + $0x14] sm:$0xf]
      %v253 = vld [vmem:[%s227 + $0x18] sm:$0xf]
      %v254 = vld [vmem:[%s227 + $0x1c] sm:$0xf]
      %v255 = vld [vmem:[%s1] sm:$0xf]
      %v256 = vld [vmem:[%s1 + $0x4] sm:$0xf]
      %v257 = vld [vmem:[%s1 + $0x8] sm:$0xf]
      %v258 = vld [vmem:[%s1 + $0xc] sm:$0xf]
      %v259 = vld [vmem:[%s1 + $0x10] sm:$0xf]
      %v260 = vld [vmem:[%s1 + $0x14] sm:$0xf]
      %v261 = vld [vmem:[%s1 + $0x18] sm:$0xf]
      %v262 = vld [vmem:[%s1 + $0x1c] sm:$0xf]
      %v263 = vld [vmem:[%s1 + $0x20] sm:$0xf]
      %v264 = vld [vmem:[%s1 + $0x24] sm:$0xf]
      %v265 = vld [vmem:[%s1 + $0x28] sm:$0xf]
      %v266 = vld [vmem:[%s1 + $0x2c] sm:$0xf]
      %v267 = vld [vmem:[%s1 + $0x30] sm:$0xf]
      %v268 = vld [vmem:[%s1 + $0x34] sm:$0xf]
      %v269 = vld [vmem:[%s1 + $0x38] sm:$0xf]
      %v270 = vld [vmem:[%s1 + $0x3c] sm:$0xf]
      %v279 = vunpack.c.l.b16 %v247
      %v280 = vunpack.c.l.b16 %v248
      %v281 = vunpack.c.l.b16 %v249
      %v282 = vunpack.c.l.b16 %v250
      %v283 = vunpack.c.l.b16 %v251
      %v284 = vunpack.c.l.b16 %v252
      %v285 = vunpack.c.l.b16 %v253
      %v286 = vunpack.c.l.b16 %v254
      %v287 = vpack.c.b16 %v280, %v279
      %v288 = vpack.c.b16 %v282, %v281
      %v289 = vpack.c.b16 %v284, %v283
      %v290 = vpack.c.b16 %v286, %v285
      %v311 = vunpack.c.l.b16 %v255
      %v312 = vunpack.c.l.b16 %v256
      %v313 = vunpack.c.l.b16 %v257
      %v314 = vunpack.c.l.b16 %v258
      %v315 = vunpack.c.l.b16 %v259
      %v316 = vunpack.c.l.b16 %v260
      %v317 = vunpack.c.l.b16 %v261
      %v318 = vunpack.c.l.b16 %v262
      %v319 = vunpack.c.l.b16 %v263
      %v320 = vunpack.c.l.b16 %v264
      %v321 = vunpack.c.l.b16 %v265
      %v322 = vunpack.c.l.b16 %v266
      %v323 = vunpack.c.l.b16 %v267
      %v324 = vunpack.c.l.b16 %v268
      %v325 = vunpack.c.l.b16 %v269
      %v326 = vunpack.c.l.b16 %v270
      %v327 = vpack.c.b16 %v312, %v311
      %v328 = vpack.c.b16 %v314, %v313
      %v329 = vpack.c.b16 %v316, %v315
      %v330 = vpack.c.b16 %v318, %v317
      %v331 = vpack.c.b16 %v320, %v319
      %v332 = vpack.c.b16 %v322, %v321
      %v333 = vpack.c.b16 %v324, %v323
      %v334 = vpack.c.b16 %v326, %v325
      %343 = vmatprep.subr.bf16.mxu0 0
      %344 = vmatpush1.bf16.msra.mxu0 %v334
      %345 = vmatprep.subr.bf16.mxu0 0
      %346 = vmatpush1.bf16.msra.mxu0 %v333
      %347 = vmatprep.subr.bf16.mxu0 0
      %348 = vmatpush1.bf16.msra.mxu0 %v332
      %349 = vmatprep.subr.bf16.mxu0 0
      %350 = vmatpush1.bf16.msra.mxu0 %v331
      %351 = vmatprep.subr.bf16.mxu0 0
      %352 = vmatpush1.bf16.msra.mxu0 %v330
      %353 = vmatprep.subr.bf16.mxu0 0
      %354 = vmatpush1.bf16.msra.mxu0 %v329
      %355 = vmatprep.subr.bf16.mxu0 0
      %356 = vmatpush1.bf16.msra.mxu0 %v328
      %357 = vmatprep.subr.bf16.mxu0 0
      %358 = vmatpush1.bf16.msra.mxu0 %v327
      %359 = vmatprep.subr.bf16.mxu0 0
      %360 = vmatpush2.bf16.msra.mxu0 0
      %361 = vmatprep.subr.bf16.mxu0 0
      %362 = vmatpush2.bf16.msra.mxu0 0
      %363 = vmatprep.subr.bf16.mxu0 0
      %364 = vmatpush2.bf16.msra.mxu0 0
      %365 = vmatprep.subr.bf16.mxu0 0
      %366 = vmatpush2.bf16.msra.mxu0 0
      %367 = vmatprep.subr.bf16.mxu0 0
      %368 = vmatpush2.bf16.msra.mxu0 0
      %369 = vmatprep.subr.bf16.mxu0 0
      %370 = vmatpush2.bf16.msra.mxu0 0
      %371 = vmatprep.subr.bf16.mxu0 0
      %372 = vmatpush2.bf16.msra.mxu0 0
      %373 = vmatprep.subr.bf16.mxu0 0
      %374 = vmatpush2.bf16.msra.mxu0 0
      %375 = vmatprep.mubr.bf16.mxu0 0
      %376 = vmatmul.mubr.bf16.gmra.mxu0 %v287
      %v377 = vpop.f32.mrf.mxu0
      %v378 = vadd.f32 0.0, %v377
      %v379 = vpop.f32.mrf.mxu0
      %v380 = vpop.f32.mrf.mxu0
      %v381 = vadd.f32 0.0, %v380
      %v382 = vpop.f32.mrf.mxu0
      %383 = vmatprep.mubr.bf16.mxu0 0
      %384 = vmatmul.mubr.bf16.gmra.mxu0 %v288
      %v385 = vpop.f32.mrf.mxu0
      %v386 = vadd.f32 0.0, %v385
      %v387 = vpop.f32.mrf.mxu0
      %v388 = vpop.f32.mrf.mxu0
      %v389 = vadd.f32 0.0, %v388
      %v390 = vpop.f32.mrf.mxu0
      %391 = vmatprep.mubr.bf16.mxu0 0
      %392 = vmatmul.mubr.bf16.gmra.mxu0 %v289
      %v393 = vpop.f32.mrf.mxu0
      %v394 = vadd.f32 0.0, %v393
      %v395 = vpop.f32.mrf.mxu0
      %v396 = vpop.f32.mrf.mxu0
      %v397 = vadd.f32 0.0, %v396
      %v398 = vpop.f32.mrf.mxu0
      %399 = vmatprep.mubr.bf16.mxu0 0
      %400 = vmatmul.mubr.bf16.gmra.mxu0 %v290
      %v401 = vpop.f32.mrf.mxu0
      %v402 = vadd.f32 0.0, %v401
      %v403 = vpop.f32.mrf.mxu0
      %v404 = vpop.f32.mrf.mxu0
      %v405 = vadd.f32 0.0, %v404
      %v406 = vpop.f32.mrf.mxu0
      %407 = vdwg.mxu0
      %v408 = vpack.c.bf16 %v381, %v378
      %v409 = vpack.c.bf16 %v389, %v386
      %v410 = vpack.c.bf16 %v397, %v394
      %v411 = vpack.c.bf16 %v405, %v402
      %v416 = vunpack.c.l.b16 %v408
      %v417 = vunpack.c.h.b16 %v408
      %v418 = vunpack.c.l.b16 %v409
      %v419 = vunpack.c.h.b16 %v409
      %v420 = vunpack.c.l.b16 %v410
      %v421 = vunpack.c.h.b16 %v410
      %v422 = vunpack.c.l.b16 %v411
      %v423 = vunpack.c.h.b16 %v411
      %v424 = vpack.c.b16 %v416, %v416
      %v425 = vpack.c.b16 %v417, %v417
      %v426 = vpack.c.b16 %v418, %v418
      %v427 = vpack.c.b16 %v419, %v419
      %v428 = vpack.c.b16 %v420, %v420
      %v429 = vpack.c.b16 %v421, %v421
      %v430 = vpack.c.b16 %v422, %v422
      %v431 = vpack.c.b16 %v423, %v423
      %440 = vst [vmem:[%s235] sm:$0xf] %v424
      %441 = vst [vmem:[%s235 + $0x4] sm:$0xf] %v425
      %442 = vst [vmem:[%s235 + $0x8] sm:$0xf] %v426
      %443 = vst [vmem:[%s235 + $0xc] sm:$0xf] %v427
      %444 = vst [vmem:[%s235 + $0x10] sm:$0xf] %v428
      %445 = vst [vmem:[%s235 + $0x14] sm:$0xf] %v429
      %446 = vst [vmem:[%s235 + $0x18] sm:$0xf] %v430
      %447 = vst [vmem:[%s235 + $0x1c] sm:$0xf] %v431
      %p448 = scmp.eq.s32.totalorder %s21, 0
      // Predicated region
      $region29: #{downsample_step.6} parent=27 // pred_check
        %p449 = pneg %p448
      $region30: #{downsample_step.6} parent=27 // pred_check_branch
        %451 = sbr.rel (%p449) target = $region32
      $region31: #{downsample_step.6} parent=27 // pred_region
        %452 = vst [vmem:[%s241] sm:$0xff] 0.0
        %453 = vst [vmem:[%s245] sm:$0xff] 0.0
      $region32: #{downsample_step.6} parent=27 // pred_fallthru
        _
      %v454 = vld [vmem:[%s241] sm:$0xff]
      %v455 = vadd.f32 %v378, %v381
      %v456 = vadd.f32 %v455, %v386
      %v457 = vadd.f32 %v456, %v389
      %v458 = vadd.f32 %v457, %v394
      %v459 = vadd.f32 %v458, %v397
      %v460 = vadd.f32 %v459, %v402
      %v461 = vadd.f32 %v460, %v405
      %v462 = vadd.f32 %v454, %v461
      %463 = vst [vmem:[%s241] sm:$0xff] %v462
      %v464 = vld [vmem:[%s245] sm:$0xff]
      %v465 = vmul.f32 %v378, %v378
      %v466 = vmul.f32 %v381, %v381
      %v467 = vmul.f32 %v386, %v386
      %v468 = vmul.f32 %v389, %v389
      %v469 = vmul.f32 %v394, %v394
      %v470 = vmul.f32 %v397, %v397
      %v471 = vmul.f32 %v402, %v402
      %v472 = vmul.f32 %v405, %v405
      %v473 = vadd.f32 %v465, %v466
      %v474 = vadd.f32 %v473, %v467
      %v475 = vadd.f32 %v474, %v468
      %v476 = vadd.f32 %v475, %v469
      %v477 = vadd.f32 %v476, %v470
      %v478 = vadd.f32 %v477, %v471
      %v479 = vadd.f32 %v478, %v472
      %v480 = vadd.f32 %v464, %v479
      %481 = vst [vmem:[%s245] sm:$0xff] %v480
      %s482 = sadd.s32 %s20, %s21
      %s483 = smul.u32 8, %s482
      %p484 = scmp.lt.s32.totalorder %s483, 15
      %s485 = scalar_select %p484, %s483, 15
      %s486 = smul.addr %s485, 4
      %s487 = scalar_lea.vmem %s2, %s486
      %p488 = scmp.lt.s32.totalorder %s20, 1
      %s489 = scalar_select %p488, %s20, 1
      %s490 = smul.addr %s489, 8
      %s491 = scalar_lea.vmem %s3, %s490
      %p492 = scmp.lt.s32.totalorder %s20, 1
      %s493 = scalar_select %p492, %s20, 1
      %s494 = smul.addr %s493, 8
      %s495 = scalar_lea.vmem %s4, %s494
      // Predicated region
      $region33: #{downsample_step.6} parent=27 // pred_check
        %p496 = pneg %p97
      $region34: #{downsample_step.6} parent=27 // pred_check_branch
        %498 = sbr.rel (%p496) target = $region36
      $region35: #{downsample_step.6} parent=27 // pred_region
        %s499 = sadd.s32 %s20, %s21
        %s500 = smul.u32 8, %s499
      $region36: #{downsample_step.6} parent=27 // pred_fallthru
        _
      // Predicated region
      $region37: #{downsample_step.6} parent=27 // pred_check
        %p501 = pneg %p123
      $region38: #{downsample_step.6} parent=27 // pred_check_branch
        %503 = sbr.rel (%p501) target = $region40
      $region39: #{downsample_step.6} parent=27 // pred_region
        _
      $region40: #{downsample_step.6} parent=27 // pred_fallthru
        _
      // Predicated region
      $region41: #{downsample_step.6} parent=27 // pred_check
        %p504 = pneg %p149
      $region42: #{downsample_step.6} parent=27 // pred_check_branch
        %506 = sbr.rel (%p504) target = $region44
      $region43: #{downsample_step.6} parent=27 // pred_region
        _
      $region44: #{downsample_step.6} parent=27 // pred_fallthru
        _
    $region28: #{downsample_step.6} parent=5 // pred_fallthru
      _
    %p507 = scmp.le.s32.totalorder 2, %s11
    // Predicated region
    $region45: #{downsample_step.6} parent=5 // pred_check
      %p508 = pneg %p507
    $region46: #{downsample_step.6} parent=5 // pred_check_branch
      %510 = sbr.rel (%p508) target = $region48
    $region47: #{downsample_step.6} parent=5 // pred_region
      %s511 = ssub.s32 %s11, 2
      // Predicated region
      $region49: #{downsample_step.6} parent=47 // pred_check
        %p512 = pneg %p103
      $region50: #{downsample_step.6} parent=47 // pred_check_branch
        %514 = sbr.rel (%p512) target = $region52
      $region51: #{downsample_step.6} parent=47 // pred_region
        %s515 = sadd.s32 %s22, %s23
        %s516 = smul.u32 8, %s515
        %p517 = scmp.lt.s32.totalorder %s516, 15
        %s518 = scalar_select %p517, %s516, 15
        %s519 = smul.addr %s518, 4
        %s520 = scalar_lea.vmem %s2, %s519
      $region52: #{downsample_step.6} parent=47 // pred_fallthru
        _
      // Predicated region
      $region53: #{downsample_step.6} parent=47 // pred_check
        %p521 = pneg %p129
      $region54: #{downsample_step.6} parent=47 // pred_check_branch
        %523 = sbr.rel (%p521) target = $region56
      $region55: #{downsample_step.6} parent=47 // pred_region
        %p524 = scmp.lt.s32.totalorder %s22, 1
        %s525 = scalar_select %p524, %s22, 1
        %s526 = smul.addr %s525, 8
        %s527 = scalar_lea.vmem %s3, %s526
      $region56: #{downsample_step.6} parent=47 // pred_fallthru
        _
      // Predicated region
      $region57: #{downsample_step.6} parent=47 // pred_check
        %p528 = pneg %p155
      $region58: #{downsample_step.6} parent=47 // pred_check_branch
        %530 = sbr.rel (%p528) target = $region60
      $region59: #{downsample_step.6} parent=47 // pred_region
        %p531 = scmp.lt.s32.totalorder %s22, 1
        %s532 = scalar_select %p531, %s22, 1
        %s533 = smul.addr %s532, 8
        %s534 = scalar_lea.vmem %s4, %s533
      $region60: #{downsample_step.6} parent=47 // pred_fallthru
        _
    $region48: #{downsample_step.6} parent=5 // pred_fallthru
      _
  $region6: #{downsample_step.6} parent=0 // loop_footer
    %s15 = sadd.s32 1, %s11
  $region7: #{downsample_step.6} parent=0 // loop_footer_branch
    %10 = sbr.rel target = $region3
  $region8: #{downsample_step.6} parent=0 // loop_exit
    _

// kernel: downsample_step.8
$region0: #{downsample_step.8}
  #allocation0 [shape = 'u32[]', space=smem, size = 0x4, offset = 0x4, fixed_abs, tag = 'smem constant byte address 0x4 - core index']
  #allocation1 [shape = 'u32[144,128]{1,0:T(1,128)}', space=vmem, size = 0x12000, scoped, tag = 'internal scratch']
  %s0 = inlined_call_operand.vmem [shape: bf16[128,1152], index: 0, kind: input, shape index: {}]
  %s1 = inlined_call_operand.vmem [shape: bf16[1152,128], index: 1, kind: input, shape index: {}]
  %s2 = inlined_call_operand.vmem [shape: bf16[128,128], index: 2, kind: output, shape index: {0}]
  %s3 = inlined_call_operand.vmem [shape: f32[16,128], index: 3, kind: output, shape index: {1}]
  %s4 = inlined_call_operand.vmem [shape: f32[16,128], index: 4, kind: output, shape index: {2}]
  %5 = xla_tuple %s2, %s3, %s4
  %s6 = sld [smem:[#allocation0]]
  $region61: #{downsample_step.8} parent=0
    _
  %s8 = ssub.s32 1, %s6
  %s9 = scalar_select 0, %s8, %s6
  loop: start=0, step=1, limit=4
  $region2: #{downsample_step.8} parent=0 // loop_pre_header
    _
  $region3: #{downsample_step.8} parent=0 // loop_header
    %s11 = sphi 0, %s15
    %p12 = scmp.ge.s32.totalorder %s11, 4
    %s18 = sphi 0, %s30
    %s19 = sphi 0, %s26
    %s20 = sphi 0, %s18
    %s21 = sphi 0, %s19
    %s22 = sphi 0, %s20
    %s23 = sphi 0, %s21
    %s35 = sphi 0, %s37
    %s38 = sphi 0, %s35
    %s39 = sphi 0, %s38
    %s55 = sphi 0, %s39
    %s59 = sphi 0, %s59
    %s61 = sphi 0, %s59
    %s62 = sphi 0, %s61
    %s76 = sphi 0, %s62
    %s84 = sphi 0, %s86
    %s87 = sphi 0, %s84
    %s88 = sphi 0, %s87
    %s104 = sphi 0, %s88
    %s110 = sphi 0, %s112
    %s113 = sphi 0, %s110
    %s114 = sphi 0, %s113
    %s130 = sphi 0, %s114
    %s136 = sphi 0, %s138
    %s139 = sphi 0, %s136
    %s140 = sphi 0, %s139
    %s156 = sphi 0, %s140
  $region4: #{downsample_step.8} parent=0 // loop_header_branch
    %14 = sbr.rel (%p12) target = $region8
  $region5: #{downsample_step.8} parent=0 // loop_body
    %s16 = ssub.s32 %s11, 1
    %s17 = ssub.s32 %s11, 2
    %s24 = sadd.s32 1, %s19
    %p25 = scmp.ge.s32.totalorder %s24, 1
    %s26 = scalar_select %p25, 0, %s24
    %s27 = sadd.s32 1, %s18
    %s28 = scalar_select %p25, %s27, %s18
    %p29 = scmp.ge.s32.totalorder %s28, 2
    %s30 = scalar_select %p29, 0, %s28
    %s31 = sadd.s32 %s18, %s19
    %s32 = sadd.s32 %s30, %s26
    %s33 = ssub.s32 %s31, %s32
    %p34 = scmp.eq.s32.totalorder %s33, 0
    %s36 = sadd.s32 %s35, 1
    %s37 = scalar_select %p34, %s35, %s36
    %p40 = pneg %p34
    %p41 = scmp.eq.s32.totalorder %s11, 1
    %p42 = por %p40, %p41
    %p43 = scmp.ne.s32.totalorder %s35, %s38
    %p44 = scmp.eq.s32.totalorder %s11, 0
    %p45 = por %p43, %p44
    %p46 = scmp.ne.s32.totalorder %s35, %s38
    %p47 = scmp.eq.s32.totalorder %s16, 1
    %p48 = por %p46, %p47
    %p49 = scmp.ne.s32.totalorder %s38, %s39
    %p50 = scmp.eq.s32.totalorder %s16, 0
    %p51 = por %p49, %p50
    %p52 = scmp.ne.s32.totalorder %s38, %s39
    %p53 = scmp.eq.s32.totalorder %s17, 1
    %p54 = por %p52, %p53
    %p56 = scmp.ne.s32.totalorder %s39, %s55
    %p57 = scmp.eq.s32.totalorder %s17, 0
    %p58 = por %p56, %p57
    %s60 = sadd.s32 %s59, 1
    %p63 = scmp.eq.s32.totalorder %s11, 1
    %p64 = scmp.ne.s32.totalorder %s59, %s61
    %p65 = scmp.eq.s32.totalorder %s11, 0
    %p66 = por %p64, %p65
    %p67 = scmp.ne.s32.totalorder %s59, %s61
    %p68 = scmp.eq.s32.totalorder %s16, 1
    %p69 = por %p67, %p68
    %p70 = scmp.ne.s32.totalorder %s61, %s62
    %p71 = scmp.eq.s32.totalorder %s16, 0
    %p72 = por %p70, %p71
    %p73 = scmp.ne.s32.totalorder %s61, %s62
    %p74 = scmp.eq.s32.totalorder %s17, 1
    %p75 = por %p73, %p74
    %p77 = scmp.ne.s32.totalorder %s62, %s76
    %p78 = scmp.eq.s32.totalorder %s17, 0
    %p79 = por %p77, %p78
    %s80 = sadd.s32 %s18, %s19
    %s81 = sadd.s32 %s30, %s26
    %s82 = ssub.s32 %s80, %s81
    %p83 = scmp.eq.s32.totalorder %s82, 0
    %s85 = sadd.s32 %s84, 1
    %s86 = scalar_select %p83, %s84, %s85
    %p89 = pneg %p83
    %p90 = scmp.eq.s32.totalorder %s11, 1
    %p91 = por %p89, %p90
    %p92 = scmp.ne.s32.totalorder %s84, %s87
    %p93 = scmp.eq.s32.totalorder %s11, 0
    %p94 = por %p92, %p93
    %p95 = scmp.ne.s32.totalorder %s84, %s87
    %p96 = scmp.eq.s32.totalorder %s16, 1
    %p97 = por %p95, %p96
    %p98 = scmp.ne.s32.totalorder %s87, %s88
    %p99 = scmp.eq.s32.totalorder %s16, 0
    %p100 = por %p98, %p99
    %p101 = scmp.ne.s32.totalorder %s87, %s88
    %p102 = scmp.eq.s32.totalorder %s17, 1
    %p103 = por %p101, %p102
    %p105 = scmp.ne.s32.totalorder %s88, %s104
    %p106 = scmp.eq.s32.totalorder %s17, 0
    %p107 = por %p105, %p106
    %s108 = ssub.s32 %s18, %s30
    %p109 = scmp.eq.s32.totalorder %s108, 0
    %s111 = sadd.s32 %s110, 1
    %s112 = scalar_select %p109, %s110, %s111
    %p115 = pneg %p109
    %p116 = scmp.eq.s32.totalorder %s11, 1
    %p117 = por %p115, %p116
    %p118 = scmp.ne.s32.totalorder %s110, %s113
    %p119 = scmp.eq.s32.totalorder %s11, 0
    %p120 = por %p118, %p119
    %p121 = scmp.ne.s32.totalorder %s110, %s113
    %p122 = scmp.eq.s32.totalorder %s16, 1
    %p123 = por %p121, %p122
    %p124 = scmp.ne.s32.totalorder %s113, %s114
    %p125 = scmp.eq.s32.totalorder %s16, 0
    %p126 = por %p124, %p125
    %p127 = scmp.ne.s32.totalorder %s113, %s114
    %p128 = scmp.eq.s32.totalorder %s17, 1
    %p129 = por %p127, %p128
    %p131 = scmp.ne.s32.totalorder %s114, %s130
    %p132 = scmp.eq.s32.totalorder %s17, 0
    %p133 = por %p131, %p132
    %s134 = ssub.s32 %s18, %s30
    %p135 = scmp.eq.s32.totalorder %s134, 0
    %s137 = sadd.s32 %s136, 1
    %s138 = scalar_select %p135, %s136, %s137
    %p141 = pneg %p135
    %p142 = scmp.eq.s32.totalorder %s11, 1
    %p143 = por %p141, %p142
    %p144 = scmp.ne.s32.totalorder %s136, %s139
    %p145 = scmp.eq.s32.totalorder %s11, 0
    %p146 = por %p144, %p145
    %p147 = scmp.ne.s32.totalorder %s136, %s139
    %p148 = scmp.eq.s32.totalorder %s16, 1
    %p149 = por %p147, %p148
    %p150 = scmp.ne.s32.totalorder %s139, %s140
    %p151 = scmp.eq.s32.totalorder %s16, 0
    %p152 = por %p150, %p151
    %p153 = scmp.ne.s32.totalorder %s139, %s140
    %p154 = scmp.eq.s32.totalorder %s17, 1
    %p155 = por %p153, %p154
    %p157 = scmp.ne.s32.totalorder %s140, %s156
    %p158 = scmp.eq.s32.totalorder %s17, 0
    %p159 = por %p157, %p158
    %p160 = scmp.le.s32.totalorder 1, %s11
    %p161 = scmp.lt.s32.totalorder %s11, 3
    %p162 = pnand %p160, %p161
    %p163 = pneg %p162
    // Predicated region
    $region9: #{downsample_step.8} parent=5 // pred_check
      _
    $region10: #{downsample_step.8} parent=5 // pred_check_branch
      %165 = sbr.rel (%p162) target = $region12
    $region11: #{downsample_step.8} parent=5 // pred_region
      %s166 = ssub.s32 %s11, 1
      // Predicated region
      $region13: #{downsample_step.8} parent=11 // pred_check
        %p167 = pneg %p72
      $region14: #{downsample_step.8} parent=11 // pred_check_branch
        %169 = sbr.rel (%p167) target = $region16
      $region15: #{downsample_step.8} parent=11 // pred_region
        _
      $region16: #{downsample_step.8} parent=11 // pred_fallthru
        _
    $region12: #{downsample_step.8} parent=5 // pred_fallthru
      _
    %p170 = scmp.lt.s32.totalorder %s11, 2
    // Predicated region
    $region17: #{downsample_step.8} parent=5 // pred_check
      %p171 = pneg %p170
    $region18: #{downsample_step.8} parent=5 // pred_check_branch
      %173 = sbr.rel (%p171) target = $region20
    $region19: #{downsample_step.8} parent=5 // pred_region
      // Predicated region
      $region21: #{downsample_step.8} parent=19 // pred_check
        %p174 = pneg %p45
      $region22: #{downsample_step.8} parent=19 // pred_check_branch
        %176 = sbr.rel (%p174) target = $region24
      $region23: #{downsample_step.8} parent=19 // pred_region
        %s177 = sadd.s32 %s18, %s19
        %s178 = smul.u32 8, %s177
        %p179 = scmp.lt.s32.totalorder %s178, 15
        %s180 = scalar_select %p179, %s178, 15
        %s181 = smul.addr %s180, 9
        %s182 = smul.addr %s181, 4
        %s183 = scalar_lea.vmem %s0, %s182
        %s184 = sadd.s32 %s18, %s19
        %s185 = smul.u32 8, %s184
      $region24: #{downsample_step.8} parent=19 // pred_fallthru
        _
    $region20: #{downsample_step.8} parent=5 // pred_fallthru
      _
    %p186 = scmp.le.s32.totalorder 1, %s11
    %p187 = scmp.lt.s32.totalorder %s11, 3
    %p188 = pnand %p186, %p187
    %p189 = pneg %p188
    // Predicated region
    $region25: #{downsample_step.8} parent=5 // pred_check
      _
    $region26: #{downsample_step.8} parent=5 // pred_check_branch
      %191 = sbr.rel (%p188) target = $region28
    $region27: #{downsample_step.8} parent=5 // pred_region
      %s192 = ssub.s32 %s11, 1
      %s193 = sadd.s32 %s20, %s21
      %s194 = smul.u32 8, %s193
      %p195 = scmp.lt.s32.totalorder %s194, 15
      %s196 = scalar_select %p195, %s194, 15
      %s197 = smul.addr %s196, 9
      %s198 = smul.addr %s197, 4
      %s199 = scalar_lea.vmem %s0, %s198
      %p200 = pneg %p51
      %p201 = pneg %p48
      %p202 = pneg %p72
      %p203 = pneg %p69
      %p204 = pneg %p100
      %p205 = pneg %p97
      %s206 = sadd.s32 %s20, %s21
      %s207 = smul.u32 8, %s206
      %p208 = scmp.lt.s32.totalorder %s207, 15
      %s209 = scalar_select %p208, %s207, 15
      %s210 = smul.addr %s209, 4
      %s211 = scalar_lea.vmem %s2, %s210
      %p212 = pneg %p126
      %p213 = pneg %p123
      %p214 = scmp.lt.s32.totalorder %s20, 1
      %s215 = scalar_select %p214, %s20, 1
      %s216 = smul.addr %s215, 8
      %s217 = scalar_lea.vmem %s3, %s216
      %p218 = pneg %p152
      %p219 = pneg %p149
      %p220 = scmp.lt.s32.totalorder %s20, 1
      %s221 = scalar_select %p220, %s20, 1
      %s222 = smul.addr %s221, 8
      %s223 = scalar_lea.vmem %s4, %s222
      %s224 = sadd.s32 %s20, %s21
      %s225 = smul.u32 8, %s224
      %p226 = scmp.lt.s32.totalorder %s225, 15
      %s227 = scalar_select %p226, %s225, 15
      %s228 = smul.addr %s227, 9
      %s229 = smul.addr %s228, 4
      %s230 = scalar_lea.vmem %s0, %s229
      %s231 = sadd.s32 %s20, %s21
      %s232 = smul.u32 8, %s231
      %s233 = sadd.s32 %s20, %s21
      %s234 = smul.u32 8, %s233
      %p235 = scmp.lt.s32.totalorder %s234, 15
      %s236 = scalar_select %p235, %s234, 15
      %s237 = smul.addr %s236, 4
      %s238 = scalar_lea.vmem %s2, %s237
      %s239 = sadd.s32 %s20, %s21
      %s240 = smul.u32 8, %s239
      %p241 = scmp.lt.s32.totalorder %s20, 1
      %s242 = scalar_select %p241, %s20, 1
      %s243 = smul.addr %s242, 8
      %s244 = scalar_lea.vmem %s3, %s243
      %p245 = scmp.lt.s32.totalorder %s20, 1
      %s246 = scalar_select %p245, %s20, 1
      %s247 = smul.addr %s246, 8
      %s248 = scalar_lea.vmem %s4, %s247
      %v250 = vld [vmem:[%s230] sm:$0xff]
      %v251 = vld [vmem:[%s230 + $0x8] sm:$0xff]
      %v252 = vld [vmem:[%s230 + $0x10] sm:$0xff]
      %v253 = vld [vmem:[%s230 + $0x18] sm:$0xff]
      %v254 = vld [vmem:[%s230 + $0x20] sm:$0xf]
      %v255 = vld [vmem:[%s230 + $0x24] sm:$0xff]
      %v256 = vld [vmem:[%s230 + $0x2c] sm:$0xff]
      %v257 = vld [vmem:[%s230 + $0x34] sm:$0xff]
      %v258 = vld [vmem:[%s230 + $0x3c] sm:$0xff]
      %v259 = vld [vmem:[%s230 + $0x44] sm:$0xf]
      %v260 = vld [vmem:[%s230 + $0x48] sm:$0xff]
      %v261 = vld [vmem:[%s230 + $0x50] sm:$0xff]
      %v262 = vld [vmem:[%s230 + $0x58] sm:$0xff]
      %v263 = vld [vmem:[%s230 + $0x60] sm:$0xff]
      %v264 = vld [vmem:[%s230 + $0x68] sm:$0xf]
      %v265 = vld [vmem:[%s230 + $0x6c] sm:$0xff]
      %v266 = vld [vmem:[%s230 + $0x74] sm:$0xff]
      %v267 = vld [vmem:[%s230 + $0x7c] sm:$0xff]
      %v268 = vld [vmem:[%s230 + $0x84] sm:$0xff]
      %v269 = vld [vmem:[%s230 + $0x8c] sm:$0xf]
      %v270 = vld [vmem:[%s230 + $0x90] sm:$0xff]
      %v271 = vld [vmem:[%s230 + $0x98] sm:$0xff]
      %v272 = vld [vmem:[%s230 + $0xa0] sm:$0xff]
      %v273 = vld [vmem:[%s230 + $0xa8] sm:$0xff]
      %v274 = vld [vmem:[%s230 + $0xb0] sm:$0xf]
      %v275 = vld [vmem:[%s230 + $0xb4] sm:$0xff]
      %v276 = vld [vmem:[%s230 + $0xbc] sm:$0xff]
      %v277 = vld [vmem:[%s230 + $0xc4] sm:$0xff]
      %v278 = vld [vmem:[%s230 + $0xcc] sm:$0xff]
      %v279 = vld [vmem:[%s230 + $0xd4] sm:$0xf]
      %v280 = vld [vmem:[%s230 + $0xd8] sm:$0xff]
      %v281 = vld [vmem:[%s230 + $0xe0] sm:$0xff]
      %v282 = vld [vmem:[%s230 + $0xe8] sm:$0xff]
      %v283 = vld [vmem:[%s230 + $0xf0] sm:$0xff]
      %v284 = vld [vmem:[%s230 + $0xf8] sm:$0xf]
      %v285 = vld [vmem:[%s230 + $0xfc] sm:$0xff]
      %v286 = vld [vmem:[%s230 + $0x104] sm:$0xff]
      %v287 = vld [vmem:[%s230 + $0x10c] sm:$0xff]
      %v288 = vld [vmem:[%s230 + $0x114] sm:$0xff]
      %v289 = vld [vmem:[%s230 + $0x11c] sm:$0xf]
      %v290 = vld [vmem:[%s1] sm:$0xf]
      %v291 = vld [vmem:[%s1 + $0x4] sm:$0xf]
      %v292 = vld [vmem:[%s1 + $0x8] sm:$0xf]
      %v293 = vld [vmem:[%s1 + $0xc] sm:$0xf]
      %v294 = vld [vmem:[%s1 + $0x10] sm:$0xf]
      %v295 = vld [vmem:[%s1 + $0x14] sm:$0xf]
      %v296 = vld [vmem:[%s1 + $0x18] sm:$0xf]
      %v297 = vld [vmem:[%s1 + $0x1c] sm:$0xf]
      %v298 = vld [vmem:[%s1 + $0x20] sm:$0xf]
      %v299 = vld [vmem:[%s1 + $0x24] sm:$0xf]
      %v300 = vld [vmem:[%s1 + $0x28] sm:$0xf]
      %v301 = vld [vmem:[%s1 + $0x2c] sm:$0xf]
      %v302 = vld [vmem:[%s1 + $0x30] sm:$0xf]
      %v303 = vld [vmem:[%s1 + $0x34] sm:$0xf]
      %v304 = vld [vmem:[%s1 + $0x38] sm:$0xf]
      %v305 = vld [vmem:[%s1 + $0x3c] sm:$0xf]
      %v306 = vld [vmem:[%s1 + $0x40] sm:$0xf]
      %v307 = vld [vmem:[%s1 + $0x44] sm:$0xf]
      %v308 = vld [vmem:[%s1 + $0x48] sm:$0xf]
      %v309 = vld [vmem:[%s1 + $0x4c] sm:$0xf]
      %v310 = vld [vmem:[%s1 + $0x50] sm:$0xf]
      %v311 = vld [vmem:[%s1 + $0x54] sm:$0xf]
      %v312 = vld [vmem:[%s1 + $0x58] sm:$0xf]
      %v313 = vld [vmem:[%s1 + $0x5c] sm:$0xf]
      %v314 = vld [vmem:[%s1 + $0x60] sm:$0xf]
      %v315 = vld [vmem:[%s1 + $0x64] sm:$0xf]
      %v316 = vld [vmem:[%s1 + $0x68] sm:$0xf]
      %v317 = vld [vmem:[%s1 + $0x6c] sm:$0xf]
      %v318 = vld [vmem:[%s1 + $0x70] sm:$0xf]
      %v319 = vld [vmem:[%s1 + $0x74] sm:$0xf]
      %v320 = vld [vmem:[%s1 + $0x78] sm:$0xf]
      %v321 = vld [vmem:[%s1 + $0x7c] sm:$0xf]
      %v322 = vld [vmem:[%s1 + $0x80] sm:$0xf]
      %v323 = vld [vmem:[%s1 + $0x84] sm:$0xf]
      %v324 = vld [vmem:[%s1 + $0x88] sm:$0xf]
      %v325 = vld [vmem:[%s1 + $0x8c] sm:$0xf]
      %v326 = vld [vmem:[%s1 + $0x90] sm:$0xf]
      %v327 = vld [vmem:[%s1 + $0x94] sm:$0xf]
      %v328 = vld [vmem:[%s1 + $0x98] sm:$0xf]
      %v329 = vld [vmem:[%s1 + $0x9c] sm:$0xf]
      %v330 = vld [vmem:[%s1 + $0xa0] sm:$0xf]
      %v331 = vld [vmem:[%s1 + $0xa4] sm:$0xf]
      %v332 = vld [vmem:[%s1 + $0xa8] sm:$0xf]
      %v333 = vld [vmem:[%s1 + $0xac] sm:$0xf]
      %v334 = vld [vmem:[%s1 + $0xb0] sm:$0xf]
      %v335 = vld [vmem:[%s1 + $0xb4] sm:$0xf]
      %v336 = vld [vmem:[%s1 + $0xb8] sm:$0xf]
      %v337 = vld [vmem:[%s1 + $0xbc] sm:$0xf]
      %v338 = vld [vmem:[%s1 + $0xc0] sm:$0xf]
      %v339 = vld [vmem:[%s1 + $0xc4] sm:$0xf]
      %v340 = vld [vmem:[%s1 + $0xc8] sm:$0xf]
      %v341 = vld [vmem:[%s1 + $0xcc] sm:$0xf]
      %v342 = vld [vmem:[%s1 + $0xd0] sm:$0xf]
      %v343 = vld [vmem:[%s1 + $0xd4] sm:$0xf]
      %v344 = vld [vmem:[%s1 + $0xd8] sm:$0xf]
      %v345 = vld [vmem:[%s1 + $0xdc] sm:$0xf]
      %v346 = vld [vmem:[%s1 + $0xe0] sm:$0xf]
      %v347 = vld [vmem:[%s1 + $0xe4] sm:$0xf]
      %v348 = vld [vmem:[%s1 + $0xe8] sm:$0xf]
      %v349 = vld [vmem:[%s1 + $0xec] sm:$0xf]
      %v350 = vld [vmem:[%s1 + $0xf0] sm:$0xf]
      %v351 = vld [vmem:[%s1 + $0xf4] sm:$0xf]
      %v352 = vld [vmem:[%s1 + $0xf8] sm:$0xf]
      %v353 = vld [vmem:[%s1 + $0xfc] sm:$0xf]
      %v354 = vld [vmem:[%s1 + $0x100] sm:$0xf]
      %v355 = vld [vmem:[%s1 + $0x104] sm:$0xf]
      %v356 = vld [vmem:[%s1 + $0x108] sm:$0xf]
      %v357 = vld [vmem:[%s1 + $0x10c] sm:$0xf]
      %v358 = vld [vmem:[%s1 + $0x110] sm:$0xf]
      %v359 = vld [vmem:[%s1 + $0x114] sm:$0xf]
      %v360 = vld [vmem:[%s1 + $0x118] sm:$0xf]
      %v361 = vld [vmem:[%s1 + $0x11c] sm:$0xf]
      %v362 = vld [vmem:[%s1 + $0x120] sm:$0xf]
      %v363 = vld [vmem:[%s1 + $0x124] sm:$0xf]
      %v364 = vld [vmem:[%s1 + $0x128] sm:$0xf]
      %v365 = vld [vmem:[%s1 + $0x12c] sm:$0xf]
      %v366 = vld [vmem:[%s1 + $0x130] sm:$0xf]
      %v367 = vld [vmem:[%s1 + $0x134] sm:$0xf]
      %v368 = vld [vmem:[%s1 + $0x138] sm:$0xf]
      %v369 = vld [vmem:[%s1 + $0x13c] sm:$0xf]
      %v370 = vld [vmem:[%s1 + $0x140] sm:$0xf]
      %v371 = vld [vmem:[%s1 + $0x144] sm:$0xf]
      %v372 = vld [vmem:[%s1 + $0x148] sm:$0xf]
      %v373 = vld [vmem:[%s1 + $0x14c] sm:$0xf]
      %v374 = vld [vmem:[%s1 + $0x150] sm:$0xf]
      %v375 = vld [vmem:[%s1 + $0x154] sm:$0xf]
      %v376 = vld [vmem:[%s1 + $0x158] sm:$0xf]
      %v377 = vld [vmem:[%s1 + $0x15c] sm:$0xf]
      %v378 = vld [vmem:[%s1 + $0x160] sm:$0xf]
      %v379 = vld [vmem:[%s1 + $0x164] sm:$0xf]
      %v380 = vld [vmem:[%s1 + $0x168] sm:$0xf]
      %v381 = vld [vmem:[%s1 + $0x16c] sm:$0xf]
      %v382 = vld [vmem:[%s1 + $0x170] sm:$0xf]
      %v383 = vld [vmem:[%s1 + $0x174] sm:$0xf]
      %v384 = vld [vmem:[%s1 + $0x178] sm:$0xf]
      %v385 = vld [vmem:[%s1 + $0x17c] sm:$0xf]
      %v386 = vld [vmem:[%s1 + $0x180] sm:$0xf]
      %v387 = vld [vmem:[%s1 + $0x184] sm:$0xf]
      %v388 = vld [vmem:[%s1 + $0x188] sm:$0xf]
      %v389 = vld [vmem:[%s1 + $0x18c] sm:$0xf]
      %v390 = vld [vmem:[%s1 + $0x190] sm:$0xf]
      %v391 = vld [vmem:[%s1 + $0x194] sm:$0xf]
      %v392 = vld [vmem:[%s1 + $0x198] sm:$0xf]
      %v393 = vld [vmem:[%s1 + $0x19c] sm:$0xf]
      %v394 = vld [vmem:[%s1 + $0x1a0] sm:$0xf]
      %v395 = vld [vmem:[%s1 + $0x1a4] sm:$0xf]
      %v396 = vld [vmem:[%s1 + $0x1a8] sm:$0xf]
      %v397 = vld [vmem:[%s1 + $0x1ac] sm:$0xf]
      %v398 = vld [vmem:[%s1 + $0x1b0] sm:$0xf]
      %v399 = vld [vmem:[%s1 + $0x1b4] sm:$0xf]
      %v400 = vld [vmem:[%s1 + $0x1b8] sm:$0xf]
      %v401 = vld [vmem:[%s1 + $0x1bc] sm:$0xf]
      %v402 = vld [vmem:[%s1 + $0x1c0] sm:$0xf]
      %v403 = vld [vmem:[%s1 + $0x1c4] sm:$0xf]
      %v404 = vld [vmem:[%s1 + $0x1c8] sm:$0xf]
      %v405 = vld [vmem:[%s1 + $0x1cc] sm:$0xf]
      %v406 = vld [vmem:[%s1 + $0x1d0] sm:$0xf]
      %v407 = vld [vmem:[%s1 + $0x1d4] sm:$0xf]
      %v408 = vld [vmem:[%s1 + $0x1d8] sm:$0xf]
      %v409 = vld [vmem:[%s1 + $0x1dc] sm:$0xf]
      %v410 = vld [vmem:[%s1 + $0x1e0] sm:$0xf]
      %v411 = vld [vmem:[%s1 + $0x1e4] sm:$0xf]
      %v412 = vld [vmem:[%s1 + $0x1e8] sm:$0xf]
      %v413 = vld [vmem:[%s1 + $0x1ec] sm:$0xf]
      %v414 = vld [vmem:[%s1 + $0x1f0] sm:$0xf]
      %v415 = vld [vmem:[%s1 + $0x1f4] sm:$0xf]
      %v416 = vld [vmem:[%s1 + $0x1f8] sm:$0xf]
      %v417 = vld [vmem:[%s1 + $0x1fc] sm:$0xf]
      %v418 = vld [vmem:[%s1 + $0x200] sm:$0xf]
      %v419 = vld [vmem:[%s1 + $0x204] sm:$0xf]
      %v420 = vld [vmem:[%s1 + $0x208] sm:$0xf]
      %v421 = vld [vmem:[%s1 + $0x20c] sm:$0xf]
      %v422 = vld [vmem:[%s1 + $0x210] sm:$0xf]
      %v423 = vld [vmem:[%s1 + $0x214] sm:$0xf]
      %v424 = vld [vmem:[%s1 + $0x218] sm:$0xf]
      %v425 = vld [vmem:[%s1 + $0x21c] sm:$0xf]
      %v426 = vld [vmem:[%s1 + $0x220] sm:$0xf]
      %v427 = vld [vmem:[%s1 + $0x224] sm:$0xf]
      %v428 = vld [vmem:[%s1 + $0x228] sm:$0xf]
      %v429 = vld [vmem:[%s1 + $0x22c] sm:$0xf]
      %v430 = vld [vmem:[%s1 + $0x230] sm:$0xf]
      %v431 = vld [vmem:[%s1 + $0x234] sm:$0xf]
      %v432 = vld [vmem:[%s1 + $0x238] sm:$0xf]
      %v433 = vld [vmem:[%s1 + $0x23c] sm:$0xf]
      %v474 = vunpack.c.l.b16 %v250
      %v475 = vunpack.c.h.b16 %v250
      %v476 = vunpack.c.l.b16 %v251
      %v477 = vunpack.c.h.b16 %v251
      %v478 = vunpack.c.l.b16 %v252
      %v479 = vunpack.c.h.b16 %v252
      %v480 = vunpack.c.l.b16 %v253
      %v481 = vunpack.c.h.b16 %v253
      %v482 = vunpack.c.l.b16 %v254
      %v483 = vunpack.c.l.b16 %v255
      %v484 = vunpack.c.h.b16 %v255
      %v485 = vunpack.c.l.b16 %v256
      %v486 = vunpack.c.h.b16 %v256
      %v487 = vunpack.c.l.b16 %v257
      %v488 = vunpack.c.h.b16 %v257
      %v489 = vunpack.c.l.b16 %v258
      %v490 = vunpack.c.h.b16 %v258
      %v491 = vunpack.c.l.b16 %v259
      %v492 = vunpack.c.l.b16 %v260
      %v493 = vunpack.c.h.b16 %v260
      %v494 = vunpack.c.l.b16 %v261
      %v495 = vunpack.c.h.b16 %v261
      %v496 = vunpack.c.l.b16 %v262
      %v497 = vunpack.c.h.b16 %v262
      %v498 = vunpack.c.l.b16 %v263
      %v499 = vunpack.c.h.b16 %v263
      %v500 = vunpack.c.l.b16 %v264
      %v501 = vunpack.c.l.b16 %v265
      %v502 = vunpack.c.h.b16 %v265
      %v503 = vunpack.c.l.b16 %v266
      %v504 = vunpack.c.h.b16 %v266
      %v505 = vunpack.c.l.b16 %v267
      %v506 = vunpack.c.h.b16 %v267
      %v507 = vunpack.c.l.b16 %v268
      %v508 = vunpack.c.h.b16 %v268
      %v509 = vunpack.c.l.b16 %v269
      %v510 = vunpack.c.l.b16 %v270
      %v511 = vunpack.c.h.b16 %v270
      %v512 = vunpack.c.l.b16 %v271
      %v513 = vunpack.c.h.b16 %v271
      %v514 = vunpack.c.l.b16 %v272
      %v515 = vunpack.c.h.b16 %v272
      %v516 = vunpack.c.l.b16 %v273
      %v517 = vunpack.c.h.b16 %v273
      %v518 = vunpack.c.l.b16 %v274
      %v519 = vunpack.c.l.b16 %v275
      %v520 = vunpack.c.h.b16 %v275
      %v521 = vunpack.c.l.b16 %v276
      %v522 = vunpack.c.h.b16 %v276
      %v523 = vunpack.c.l.b16 %v277
      %v524 = vunpack.c.h.b16 %v277
      %v525 = vunpack.c.l.b16 %v278
      %v526 = vunpack.c.h.b16 %v278
      %v527 = vunpack.c.l.b16 %v279
      %v528 = vunpack.c.l.b16 %v280
      %v529 = vunpack.c.h.b16 %v280
      %v530 = vunpack.c.l.b16 %v281
      %v531 = vunpack.c.h.b16 %v281
      %v532 = vunpack.c.l.b16 %v282
      %v533 = vunpack.c.h.b16 %v282
      %v534 = vunpack.c.l.b16 %v283
      %v535 = vunpack.c.h.b16 %v283
      %v536 = vunpack.c.l.b16 %v284
      %v537 = vunpack.c.l.b16 %v285
      %v538 = vunpack.c.h.b16 %v285
      %v539 = vunpack.c.l.b16 %v286
      %v540 = vunpack.c.h.b16 %v286
      %v541 = vunpack.c.l.b16 %v287
      %v542 = vunpack.c.h.b16 %v287
      %v543 = vunpack.c.l.b16 %v288
      %v544 = vunpack.c.h.b16 %v288
      %v545 = vunpack.c.l.b16 %v289
      %v546 = vpack.c.b16 %v483, %v474
      %v547 = vpack.c.b16 %v484, %v475
      %v548 = vpack.c.b16 %v485, %v476
      %v549 = vpack.c.b16 %v486, %v477
      %v550 = vpack.c.b16 %v487, %v478
      %v551 = vpack.c.b16 %v488, %v479
      %v552 = vpack.c.b16 %v489, %v480
      %v553 = vpack.c.b16 %v490, %v481
      %v554 = vpack.c.b16 %v491, %v482
      %v555 = vpack.c.b16 %v501, %v492
      %v556 = vpack.c.b16 %v502, %v493
      %v557 = vpack.c.b16 %v503, %v494
      %v558 = vpack.c.b16 %v504, %v495
      %v559 = vpack.c.b16 %v505, %v496
      %v560 = vpack.c.b16 %v506, %v497
      %v561 = vpack.c.b16 %v507, %v498
      %v562 = vpack.c.b16 %v508, %v499
      %v563 = vpack.c.b16 %v509, %v500
      %v564 = vpack.c.b16 %v519, %v510
      %v565 = vpack.c.b16 %v520, %v511
      %v566 = vpack.c.b16 %v521, %v512
      %v567 = vpack.c.b16 %v522, %v513
      %v568 = vpack.c.b16 %v523, %v514
      %v569 = vpack.c.b16 %v524, %v515
      %v570 = vpack.c.b16 %v525, %v516
      %v571 = vpack.c.b16 %v526, %v517
      %v572 = vpack.c.b16 %v527, %v518
      %v573 = vpack.c.b16 %v537, %v528
      %v574 = vpack.c.b16 %v538, %v529
      %v575 = vpack.c.b16 %v539, %v530
      %v576 = vpack.c.b16 %v540, %v531
      %v577 = vpack.c.b16 %v541, %v532
      %v578 = vpack.c.b16 %v542, %v533
      %v579 = vpack.c.b16 %v543, %v534
      %v580 = vpack.c.b16 %v544, %v535
      %v581 = vpack.c.b16 %v545, %v536
      %v762 = vunpack.c.l.b16 %v290
      %v763 = vunpack.c.l.b16 %v291
      %v764 = vunpack.c.l.b16 %v292
      %v765 = vunpack.c.l.b16 %v293
      %v766 = vunpack.c.l.b16 %v294
      %v767 = vunpack.c.l.b16 %v295
      %v768 = vunpack.c.l.b16 %v296
      %v769 = vunpack.c.l.b16 %v297
      %v770 = vunpack.c.l.b16 %v298
      %v771 = vunpack.c.l.b16 %v299
      %v772 = vunpack.c.l.b16 %v300
      %v773 = vunpack.c.l.b16 %v301
      %v774 = vunpack.c.l.b16 %v302
      %v775 = vunpack.c.l.b16 %v303
      %v776 = vunpack.c.l.b16 %v304
      %v777 = vunpack.c.l.b16 %v305
      %v778 = vunpack.c.l.b16 %v306
      %v779 = vunpack.c.l.b16 %v307
      %v780 = vunpack.c.l.b16 %v308
      %v781 = vunpack.c.l.b16 %v309
      %v782 = vunpack.c.l.b16 %v310
      %v783 = vunpack.c.l.b16 %v311
      %v784 = vunpack.c.l.b16 %v312
      %v785 = vunpack.c.l.b16 %v313
      %v786 = vunpack.c.l.b16 %v314
      %v787 = vunpack.c.l.b16 %v315
      %v788 = vunpack.c.l.b16 %v316
      %v789 = vunpack.c.l.b16 %v317
      %v790 = vunpack.c.l.b16 %v318
      %v791 = vunpack.c.l.b16 %v319
      %v792 = vunpack.c.l.b16 %v320
      %v793 = vunpack.c.l.b16 %v321
      %v794 = vunpack.c.l.b16 %v322
      %v795 = vunpack.c.l.b16 %v323
      %v796 = vunpack.c.l.b16 %v324
      %v797 = vunpack.c.l.b16 %v325
      %v798 = vunpack.c.l.b16 %v326
      %v799 = vunpack.c.l.b16 %v327
      %v800 = vunpack.c.l.b16 %v328
      %v801 = vunpack.c.l.b16 %v329
      %v802 = vunpack.c.l.b16 %v330
      %v803 = vunpack.c.l.b16 %v331
      %v804 = vunpack.c.l.b16 %v332
      %v805 = vunpack.c.l.b16 %v333
      %v806 = vunpack.c.l.b16 %v334
      %v807 = vunpack.c.l.b16 %v335
      %v808 = vunpack.c.l.b16 %v336
      %v809 = vunpack.c.l.b16 %v337
      %v810 = vunpack.c.l.b16 %v338
      %v811 = vunpack.c.l.b16 %v339
      %v812 = vunpack.c.l.b16 %v340
      %v813 = vunpack.c.l.b16 %v341
      %v814 = vunpack.c.l.b16 %v342
      %v815 = vunpack.c.l.b16 %v343
      %v816 = vunpack.c.l.b16 %v344
      %v817 = vunpack.c.l.b16 %v345
      %v818 = vunpack.c.l.b16 %v346
      %v819 = vunpack.c.l.b16 %v347
      %v820 = vunpack.c.l.b16 %v348
      %v821 = vunpack.c.l.b16 %v349
      %v822 = vunpack.c.l.b16 %v350
      %v823 = vunpack.c.l.b16 %v351
      %v824 = vunpack.c.l.b16 %v352
      %v825 = vunpack.c.l.b16 %v353
      %v826 = vunpack.c.l.b16 %v354
      %v827 = vunpack.c.l.b16 %v355
      %v828 = vunpack.c.l.b16 %v356
      %v829 = vunpack.c.l.b16 %v357
      %v830 = vunpack.c.l.b16 %v358
      %v831 = vunpack.c.l.b16 %v359
      %v832 = vunpack.c.l.b16 %v360
      %v833 = vunpack.c.l.b16 %v361
      %v834 = vunpack.c.l.b16 %v362
      %v835 = vunpack.c.l.b16 %v363
      %v836 = vunpack.c.l.b16 %v364
      %v837 = vunpack.c.l.b16 %v365
      %v838 = vunpack.c.l.b16 %v366
      %v839 = vunpack.c.l.b16 %v367
      %v840 = vunpack.c.l.b16 %v368
      %v841 = vunpack.c.l.b16 %v369
      %v842 = vunpack.c.l.b16 %v370
      %v843 = vunpack.c.l.b16 %v371
      %v844 = vunpack.c.l.b16 %v372
      %v845 = vunpack.c.l.b16 %v373
      %v846 = vunpack.c.l.b16 %v374
      %v847 = vunpack.c.l.b16 %v375
      %v848 = vunpack.c.l.b16 %v376
      %v849 = vunpack.c.l.b16 %v377
      %v850 = vunpack.c.l.b16 %v378
      %v851 = vunpack.c.l.b16 %v379
      %v852 = vunpack.c.l.b16 %v380
      %v853 = vunpack.c.l.b16 %v381
      %v854 = vunpack.c.l.b16 %v382
      %v855 = vunpack.c.l.b16 %v383
      %v856 = vunpack.c.l.b16 %v384
      %v857 = vunpack.c.l.b16 %v385
      %v858 = vunpack.c.l.b16 %v386
      %v859 = vunpack.c.l.b16 %v387
      %v860 = vunpack.c.l.b16 %v388
      %v861 = vunpack.c.l.b16 %v389
      %v862 = vunpack.c.l.b16 %v390
      %v863 = vunpack.c.l.b16 %v391
      %v864 = vunpack.c.l.b16 %v392
      %v865 = vunpack.c.l.b16 %v393
      %v866 = vunpack.c.l.b16 %v394
      %v867 = vunpack.c.l.b16 %v395
      %v868 = vunpack.c.l.b16 %v396
      %v869 = vunpack.c.l.b16 %v397
      %v870 = vunpack.c.l.b16 %v398
      %v871 = vunpack.c.l.b16 %v399
      %v872 = vunpack.c.l.b16 %v400
      %v873 = vunpack.c.l.b16 %v401
      %v874 = vunpack.c.l.b16 %v402
      %v875 = vunpack.c.l.b16 %v403
      %v876 = vunpack.c.l.b16 %v404
      %v877 = vunpack.c.l.b16 %v405
      %v878 = vunpack.c.l.b16 %v406
      %v879 = vunpack.c.l.b16 %v407
      %v880 = vunpack.c.l.b16 %v408
      %v881 = vunpack.c.l.b16 %v409
      %v882 = vunpack.c.l.b16 %v410
      %v883 = vunpack.c.l.b16 %v411
      %v884 = vunpack.c.l.b16 %v412
      %v885 = vunpack.c.l.b16 %v413
      %v886 = vunpack.c.l.b16 %v414
      %v887 = vunpack.c.l.b16 %v415
      %v888 = vunpack.c.l.b16 %v416
      %v889 = vunpack.c.l.b16 %v417
      %v890 = vunpack.c.l.b16 %v418
      %v891 = vunpack.c.l.b16 %v419
      %v892 = vunpack.c.l.b16 %v420
      %v893 = vunpack.c.l.b16 %v421
      %v894 = vunpack.c.l.b16 %v422
      %v895 = vunpack.c.l.b16 %v423
      %v896 = vunpack.c.l.b16 %v424
      %v897 = vunpack.c.l.b16 %v425
      %v898 = vunpack.c.l.b16 %v426
      %v899 = vunpack.c.l.b16 %v427
      %v900 = vunpack.c.l.b16 %v428
      %v901 = vunpack.c.l.b16 %v429
      %v902 = vunpack.c.l.b16 %v430
      %v903 = vunpack.c.l.b16 %v431
      %v904 = vunpack.c.l.b16 %v432
      %v905 = vunpack.c.l.b16 %v433
      %v906 = vpack.c.b16 %v763, %v762
      %v907 = vpack.c.b16 %v765, %v764
      %v908 = vpack.c.b16 %v767, %v766
      %v909 = vpack.c.b16 %v769, %v768
      %v910 = vpack.c.b16 %v771, %v770
      %v911 = vpack.c.b16 %v773, %v772
      %v912 = vpack.c.b16 %v775, %v774
      %v913 = vpack.c.b16 %v777, %v776
      %v914 = vpack.c.b16 %v779, %v778
      %v915 = vpack.c.b16 %v781, %v780
      %v916 = vpack.c.b16 %v783, %v782
      %v917 = vpack.c.b16 %v785, %v784
      %v918 = vpack.c.b16 %v787, %v786
      %v919 = vpack.c.b16 %v789, %v788
      %v920 = vpack.c.b16 %v791, %v790
      %v921 = vpack.c.b16 %v793, %v792
      %v922 = vpack.c.b16 %v795, %v794
      %v923 = vpack.c.b16 %v797, %v796
      %v924 = vpack.c.b16 %v799, %v798
      %v925 = vpack.c.b16 %v801, %v800
      %v926 = vpack.c.b16 %v803, %v802
      %v927 = vpack.c.b16 %v805, %v804
      %v928 = vpack.c.b16 %v807, %v806
      %v929 = vpack.c.b16 %v809, %v808
      %v930 = vpack.c.b16 %v811, %v810
      %v931 = vpack.c.b16 %v813, %v812
      %v932 = vpack.c.b16 %v815, %v814
      %v933 = vpack.c.b16 %v817, %v816
      %v934 = vpack.c.b16 %v819, %v818
      %v935 = vpack.c.b16 %v821, %v820
      %v936 = vpack.c.b16 %v823, %v822
      %v937 = vpack.c.b16 %v825, %v824
      %v938 = vpack.c.b16 %v827, %v826
      %v939 = vpack.c.b16 %v829, %v828
      %v940 = vpack.c.b16 %v831, %v830
      %v941 = vpack.c.b16 %v833, %v832
      %v942 = vpack.c.b16 %v835, %v834
      %v943 = vpack.c.b16 %v837, %v836
      %v944 = vpack.c.b16 %v839, %v838
      %v945 = vpack.c.b16 %v841, %v840
      %v946 = vpack.c.b16 %v843, %v842
      %v947 = vpack.c.b16 %v845, %v844
      %v948 = vpack.c.b16 %v847, %v846
      %v949 = vpack.c.b16 %v849, %v848
      %v950 = vpack.c.b16 %v851, %v850
      %v951 = vpack.c.b16 %v853, %v852
      %v952 = vpack.c.b16 %v855, %v854
      %v953 = vpack.c.b16 %v857, %v856
      %v954 = vpack.c.b16 %v859, %v858
      %v955 = vpack.c.b16 %v861, %v860
      %v956 = vpack.c.b16 %v863, %v862
      %v957 = vpack.c.b16 %v865, %v864
      %v958 = vpack.c.b16 %v867, %v866
      %v959 = vpack.c.b16 %v869, %v868
      %v960 = vpack.c.b16 %v871, %v870
      %v961 = vpack.c.b16 %v873, %v872
      %v962 = vpack.c.b16 %v875, %v874
      %v963 = vpack.c.b16 %v877, %v876
      %v964 = vpack.c.b16 %v879, %v878
      %v965 = vpack.c.b16 %v881, %v880
      %v966 = vpack.c.b16 %v883, %v882
      %v967 = vpack.c.b16 %v885, %v884
      %v968 = vpack.c.b16 %v887, %v886
      %v969 = vpack.c.b16 %v889, %v888
      %v970 = vpack.c.b16 %v891, %v890
      %v971 = vpack.c.b16 %v893, %v892
      %v972 = vpack.c.b16 %v895, %v894
      %v973 = vpack.c.b16 %v897, %v896
      %v974 = vpack.c.b16 %v899, %v898
      %v975 = vpack.c.b16 %v901, %v900
      %v976 = vpack.c.b16 %v903, %v902
      %v977 = vpack.c.b16 %v905, %v904
      %1050 = vmatprep.subr.bf16.mxu0 0
      %1051 = vmatpush1.bf16.msra.mxu0 %v913
      %1052 = vmatprep.subr.bf16.mxu0 0
      %1053 = vmatpush1.bf16.msra.mxu0 %v912
      %1054 = vmatprep.subr.bf16.mxu0 0
      %1055 = vmatpush1.bf16.msra.mxu0 %v911
      %1056 = vmatprep.subr.bf16.mxu0 0
      %1057 = vmatpush1.bf16.msra.mxu0 %v910
      %1058 = vmatprep.subr.bf16.mxu0 0
      %1059 = vmatpush1.bf16.msra.mxu0 %v909
      %1060 = vmatprep.subr.bf16.mxu0 0
      %1061 = vmatpush1.bf16.msra.mxu0 %v908
      %1062 = vmatprep.subr.bf16.mxu0 0
      %1063 = vmatpush1.bf16.msra.mxu0 %v907
      %1064 = vmatprep.subr.bf16.mxu0 0
      %1065 = vmatpush1.bf16.msra.mxu0 %v906
      %1066 = vmatprep.subr.bf16.mxu0 0
      %1067 = vmatpush2.bf16.msra.mxu0 %v921
      %1068 = vmatprep.subr.bf16.mxu0 0
      %1069 = vmatpush2.bf16.msra.mxu0 %v920
      %1070 = vmatprep.subr.bf16.mxu0 0
      %1071 = vmatpush2.bf16.msra.mxu0 %v919
      %1072 = vmatprep.subr.bf16.mxu0 0
      %1073 = vmatpush2.bf16.msra.mxu0 %v918
      %1074 = vmatprep.subr.bf16.mxu0 0
      %1075 = vmatpush2.bf16.msra.mxu0 %v917
      %1076 = vmatprep.subr.bf16.mxu0 0
      %1077 = vmatpush2.bf16.msra.mxu0 %v916
      %1078 = vmatprep.subr.bf16.mxu0 0
      %1079 = vmatpush2.bf16.msra.mxu0 %v915
      %1080 = vmatprep.subr.bf16.mxu0 0
      %1081 = vmatpush2.bf16.msra.mxu0 %v914
      %1082 = vmatprep.mubr.bf16.mxu0 %v547
      %1083 = vmatmul.mubr.bf16.gmra.mxu0 %v546
      %v1084 = vpop.f32.mrf.mxu0
      %v1085 = vadd.f32 0.0, %v1084
      %v1086 = vpop.f32.mrf.mxu0
      %v1087 = vpop.f32.mrf.mxu0
      %v1088 = vadd.f32 0.0, %v1087
      %v1089 = vpop.f32.mrf.mxu0
      %1090 = vmatprep.mubr.bf16.mxu0 %v556
      %1091 = vmatmul.mubr.bf16.gmra.mxu0 %v555
      %v1092 = vpop.f32.mrf.mxu0
      %v1093 = vadd.f32 0.0, %v1092
      %v1094 = vpop.f32.mrf.mxu0
      %v1095 = vpop.f32.mrf.mxu0
      %v1096 = vadd.f32 0.0, %v1095
      %v1097 = vpop.f32.mrf.mxu0
      %1098 = vmatprep.mubr.bf16.mxu0 %v565
      %1099 = vmatmul.mubr.bf16.gmra.mxu0 %v564
      %v1100 = vpop.f32.mrf.mxu0
      %v1101 = vadd.f32 0.0, %v1100
      %v1102 = vpop.f32.mrf.mxu0
      %v1103 = vpop.f32.mrf.mxu0
      %v1104 = vadd.f32 0.0, %v1103
      %v1105 = vpop.f32.mrf.mxu0
      %1106 = vmatprep.mubr.bf16.mxu0 %v574
      %1107 = vmatmul.mubr.bf16.gmra.mxu0 %v573
      %v1108 = vpop.f32.mrf.mxu0
      %v1109 = vadd.f32 0.0, %v1108
      %v1110 = vpop.f32.mrf.mxu0
      %v1111 = vpop.f32.mrf.mxu0
      %v1112 = vadd.f32 0.0, %v1111
      %v1113 = vpop.f32.mrf.mxu0
      %1114 = vdwg.mxu0
      %1115 = vmatprep.subr.bf16.mxu0 0
      %1116 = vmatpush1.bf16.msra.mxu0 %v929
      %1117 = vmatprep.subr.bf16.mxu0 0
      %1118 = vmatpush1.bf16.msra.mxu0 %v928
      %1119 = vmatprep.subr.bf16.mxu0 0
      %1120 = vmatpush1.bf16.msra.mxu0 %v927
      %1121 = vmatprep.subr.bf16.mxu0 0
      %1122 = vmatpush1.bf16.msra.mxu0 %v926
      %1123 = vmatprep.subr.bf16.mxu0 0
      %1124 = vmatpush1.bf16.msra.mxu0 %v925
      %1125 = vmatprep.subr.bf16.mxu0 0
      %1126 = vmatpush1.bf16.msra.mxu0 %v924
      %1127 = vmatprep.subr.bf16.mxu0 0
      %1128 = vmatpush1.bf16.msra.mxu0 %v923
      %1129 = vmatprep.subr.bf16.mxu0 0
      %1130 = vmatpush1.bf16.msra.mxu0 %v922
      %1131 = vmatprep.subr.bf16.mxu0 0
      %1132 = vmatpush2.bf16.msra.mxu0 %v937
      %1133 = vmatprep.subr.bf16.mxu0 0
      %1134 = vmatpush2.bf16.msra.mxu0 %v936
      %1135 = vmatprep.subr.bf16.mxu0 0
      %1136 = vmatpush2.bf16.msra.mxu0 %v935
      %1137 = vmatprep.subr.bf16.mxu0 0
      %1138 = vmatpush2.bf16.msra.mxu0 %v934
      %1139 = vmatprep.subr.bf16.mxu0 0
      %1140 = vmatpush2.bf16.msra.mxu0 %v933
      %1141 = vmatprep.subr.bf16.mxu0 0
      %1142 = vmatpush2.bf16.msra.mxu0 %v932
      %1143 = vmatprep.subr.bf16.mxu0 0
      %1144 = vmatpush2.bf16.msra.mxu0 %v931
      %1145 = vmatprep.subr.bf16.mxu0 0
      %1146 = vmatpush2.bf16.msra.mxu0 %v930
      %1147 = vmatprep.mubr.bf16.mxu0 %v549
      %1148 = vmatmul.mubr.bf16.gmra.mxu0 %v548
      %v1149 = vpop.f32.mrf.mxu0
      %v1150 = vadd.f32 %v1085, %v1149
      %v1151 = vpop.f32.mrf.mxu0
      %v1152 = vpop.f32.mrf.mxu0
      %v1153 = vadd.f32 %v1088, %v1152
      %v1154 = vpop.f32.mrf.mxu0
      %1155 = vmatprep.mubr.bf16.mxu0 %v558
      %1156 = vmatmul.mubr.bf16.gmra.mxu0 %v557
      %v1157 = vpop.f32.mrf.mxu0
      %v1158 = vadd.f32 %v1093, %v1157
      %v1159 = vpop.f32.mrf.mxu0
      %v1160 = vpop.f32.mrf.mxu0
      %v1161 = vadd.f32 %v1096, %v1160
      %v1162 = vpop.f32.mrf.mxu0
      %1163 = vmatprep.mubr.bf16.mxu0 %v567
      %1164 = vmatmul.mubr.bf16.gmra.mxu0 %v566
      %v1165 = vpop.f32.mrf.mxu0
      %v1166 = vadd.f32 %v1101, %v1165
      %v1167 = vpop.f32.mrf.mxu0
      %v1168 = vpop.f32.mrf.mxu0
      %v1169 = vadd.f32 %v1104, %v1168
      %v1170 = vpop.f32.mrf.mxu0
      %1171 = vmatprep.mubr.bf16.mxu0 %v576
      %1172 = vmatmul.mubr.bf16.gmra.mxu0 %v575
      %v1173 = vpop.f32.mrf.mxu0
      %v1174 = vadd.f32 %v1109, %v1173
      %v1175 = vpop.f32.mrf.mxu0
      %v1176 = vpop.f32.mrf.mxu0
      %v1177 = vadd.f32 %v1112, %v1176
      %v1178 = vpop.f32.mrf.mxu0
      %1179 = vdwg.mxu0
      %1180 = vmatprep.subr.bf16.mxu0 0
      %1181 = vmatpush1.bf16.msra.mxu0 %v945
      %1182 = vmatprep.subr.bf16.mxu0 0
      %1183 = vmatpush1.bf16.msra.mxu0 %v944
      %1184 = vmatprep.subr.bf16.mxu0 0
      %1185 = vmatpush1.bf16.msra.mxu0 %v943
      %1186 = vmatprep.subr.bf16.mxu0 0
      %1187 = vmatpush1.bf16.msra.mxu0 %v942
      %1188 = vmatprep.subr.bf16.mxu0 0
      %1189 = vmatpush1.bf16.msra.mxu0 %v941
      %1190 = vmatprep.subr.bf16.mxu0 0
      %1191 = vmatpush1.bf16.msra.mxu0 %v940
      %1192 = vmatprep.subr.bf16.mxu0 0
      %1193 = vmatpush1.bf16.msra.mxu0 %v939
      %1194 = vmatprep.subr.bf16.mxu0 0
      %1195 = vmatpush1.bf16.msra.mxu0 %v938
      %1196 = vmatprep.subr.bf16.mxu0 0
      %1197 = vmatpush2.bf16.msra.mxu0 %v953
      %1198 = vmatprep.subr.bf16.mxu0 0
      %1199 = vmatpush2.bf16.msra.mxu0 %v952
      %1200 = vmatprep.subr.bf16.mxu0 0
      %1201 = vmatpush2.bf16.msra.mxu0 %v951
      %1202 = vmatprep.subr.bf16.mxu0 0
      %1203 = vmatpush2.bf16.msra.mxu0 %v950
      %1204 = vmatprep.subr.bf16.mxu0 0
      %1205 = vmatpush2.bf16.msra.mxu0 %v949
      %1206 = vmatprep.subr.bf16.mxu0 0
      %1207 = vmatpush2.bf16.msra.mxu0 %v948
      %1208 = vmatprep.subr.bf16.mxu0 0
      %1209 = vmatpush2.bf16.msra.mxu0 %v947
      %1210 = vmatprep.subr.bf16.mxu0 0
      %1211 = vmatpush2.bf16.msra.mxu0 %v946
      %1212 = vmatprep.mubr.bf16.mxu0 %v551
      %1213 = vmatmul.mubr.bf16.gmra.mxu0 %v550
      %v1214 = vpop.f32.mrf.mxu0
      %v1215 = vadd.f32 %v1150, %v1214
      %v1216 = vpop.f32.mrf.mxu0
      %v1217 = vpop.f32.mrf.mxu0
      %v1218 = vadd.f32 %v1153, %v1217
      %v1219 = vpop.f32.mrf.mxu0
      %1220 = vmatprep.mubr.bf16.mxu0 %v560
      %1221 = vmatmul.mubr.bf16.gmra.mxu0 %v559
      %v1222 = vpop.f32.mrf.mxu0
      %v1223 = vadd.f32 %v1158, %v1222
      %v1224 = vpop.f32.mrf.mxu0
      %v1225 = vpop.f32.mrf.mxu0
      %v1226 = vadd.f32 %v1161, %v1225
      %v1227 = vpop.f32.mrf.mxu0
      %1228 = vmatprep.mubr.bf16.mxu0 %v569
      %1229 = vmatmul.mubr.bf16.gmra.mxu0 %v568
      %v1230 = vpop.f32.mrf.mxu0
      %v1231 = vadd.f32 %v1166, %v1230
      %v1232 = vpop.f32.mrf.mxu0
      %v1233 = vpop.f32.mrf.mxu0
      %v1234 = vadd.f32 %v1169, %v1233
      %v1235 = vpop.f32.mrf.mxu0
      %1236 = vmatprep.mubr.bf16.mxu0 %v578
      %1237 = vmatmul.mubr.bf16.gmra.mxu0 %v577
      %v1238 = vpop.f32.mrf.mxu0
      %v1239 = vadd.f32 %v1174, %v1238
      %v1240 = vpop.f32.mrf.mxu0
      %v1241 = vpop.f32.mrf.mxu0
      %v1242 = vadd.f32 %v1177, %v1241
      %v1243 = vpop.f32.mrf.mxu0
      %1244 = vdwg.mxu0
      %1245 = vmatprep.subr.bf16.mxu0 0
      %1246 = vmatpush1.bf16.msra.mxu0 %v961
      %1247 = vmatprep.subr.bf16.mxu0 0
      %1248 = vmatpush1.bf16.msra.mxu0 %v960
      %1249 = vmatprep.subr.bf16.mxu0 0
      %1250 = vmatpush1.bf16.msra.mxu0 %v959
      %1251 = vmatprep.subr.bf16.mxu0 0
      %1252 = vmatpush1.bf16.msra.mxu0 %v958
      %1253 = vmatprep.subr.bf16.mxu0 0
      %1254 = vmatpush1.bf16.msra.mxu0 %v957
      %1255 = vmatprep.subr.bf16.mxu0 0
      %1256 = vmatpush1.bf16.msra.mxu0 %v956
      %1257 = vmatprep.subr.bf16.mxu0 0
      %1258 = vmatpush1.bf16.msra.mxu0 %v955
      %1259 = vmatprep.subr.bf16.mxu0 0
      %1260 = vmatpush1.bf16.msra.mxu0 %v954
      %1261 = vmatprep.subr.bf16.mxu0 0
      %1262 = vmatpush2.bf16.msra.mxu0 %v969
      %1263 = vmatprep.subr.bf16.mxu0 0
      %1264 = vmatpush2.bf16.msra.mxu0 %v968
      %1265 = vmatprep.subr.bf16.mxu0 0
      %1266 = vmatpush2.bf16.msra.mxu0 %v967
      %1267 = vmatprep.subr.bf16.mxu0 0
      %1268 = vmatpush2.bf16.msra.mxu0 %v966
      %1269 = vmatprep.subr.bf16.mxu0 0
      %1270 = vmatpush2.bf16.msra.mxu0 %v965
      %1271 = vmatprep.subr.bf16.mxu0 0
      %1272 = vmatpush2.bf16.msra.mxu0 %v964
      %1273 = vmatprep.subr.bf16.mxu0 0
      %1274 = vmatpush2.bf16.msra.mxu0 %v963
      %1275 = vmatprep.subr.bf16.mxu0 0
      %1276 = vmatpush2.bf16.msra.mxu0 %v962
      %1277 = vmatprep.mubr.bf16.mxu0 %v553
      %1278 = vmatmul.mubr.bf16.gmra.mxu0 %v552
      %v1279 = vpop.f32.mrf.mxu0
      %v1280 = vadd.f32 %v1215, %v1279
      %v1281 = vpop.f32.mrf.mxu0
      %v1282 = vpop.f32.mrf.mxu0
      %v1283 = vadd.f32 %v1218, %v1282
      %v1284 = vpop.f32.mrf.mxu0
      %1285 = vmatprep.mubr.bf16.mxu0 %v562
      %1286 = vmatmul.mubr.bf16.gmra.mxu0 %v561
      %v1287 = vpop.f32.mrf.mxu0
      %v1288 = vadd.f32 %v1223, %v1287
      %v1289 = vpop.f32.mrf.mxu0
      %v1290 = vpop.f32.mrf.mxu0
      %v1291 = vadd.f32 %v1226, %v1290
      %v1292 = vpop.f32.mrf.mxu0
      %1293 = vmatprep.mubr.bf16.mxu0 %v571
      %1294 = vmatmul.mubr.bf16.gmra.mxu0 %v570
      %v1295 = vpop.f32.mrf.mxu0
      %v1296 = vadd.f32 %v1231, %v1295
      %v1297 = vpop.f32.mrf.mxu0
      %v1298 = vpop.f32.mrf.mxu0
      %v1299 = vadd.f32 %v1234, %v1298
      %v1300 = vpop.f32.mrf.mxu0
      %1301 = vmatprep.mubr.bf16.mxu0 %v580
      %1302 = vmatmul.mubr.bf16.gmra.mxu0 %v579
      %v1303 = vpop.f32.mrf.mxu0
      %v1304 = vadd.f32 %v1239, %v1303
      %v1305 = vpop.f32.mrf.mxu0
      %v1306 = vpop.f32.mrf.mxu0
      %v1307 = vadd.f32 %v1242, %v1306
      %v1308 = vpop.f32.mrf.mxu0
      %1309 = vdwg.mxu0
      %1310 = vmatprep.subr.bf16.mxu0 0
      %1311 = vmatpush1.bf16.msra.mxu0 %v977
      %1312 = vmatprep.subr.bf16.mxu0 0
      %1313 = vmatpush1.bf16.msra.mxu0 %v976
      %1314 = vmatprep.subr.bf16.mxu0 0
      %1315 = vmatpush1.bf16.msra.mxu0 %v975
      %1316 = vmatprep.subr.bf16.mxu0 0
      %1317 = vmatpush1.bf16.msra.mxu0 %v974
      %1318 = vmatprep.subr.bf16.mxu0 0
      %1319 = vmatpush1.bf16.msra.mxu0 %v973
      %1320 = vmatprep.subr.bf16.mxu0 0
      %1321 = vmatpush1.bf16.msra.mxu0 %v972
      %1322 = vmatprep.subr.bf16.mxu0 0
      %1323 = vmatpush1.bf16.msra.mxu0 %v971
      %1324 = vmatprep.subr.bf16.mxu0 0
      %1325 = vmatpush1.bf16.msra.mxu0 %v970
      %1326 = vmatprep.subr.bf16.mxu0 0
      %1327 = vmatpush2.bf16.msra.mxu0 0
      %1328 = vmatprep.subr.bf16.mxu0 0
      %1329 = vmatpush2.bf16.msra.mxu0 0
      %1330 = vmatprep.subr.bf16.mxu0 0
      %1331 = vmatpush2.bf16.msra.mxu0 0
      %1332 = vmatprep.subr.bf16.mxu0 0
      %1333 = vmatpush2.bf16.msra.mxu0 0
      %1334 = vmatprep.subr.bf16.mxu0 0
      %1335 = vmatpush2.bf16.msra.mxu0 0
      %1336 = vmatprep.subr.bf16.mxu0 0
      %1337 = vmatpush2.bf16.msra.mxu0 0
      %1338 = vmatprep.subr.bf16.mxu0 0
      %1339 = vmatpush2.bf16.msra.mxu0 0
      %1340 = vmatprep.subr.bf16.mxu0 0
      %1341 = vmatpush2.bf16.msra.mxu0 0
      %1342 = vmatprep.mubr.bf16.mxu0 0
      %1343 = vmatmul.mubr.bf16.gmra.mxu0 %v554
      %v1344 = vpop.f32.mrf.mxu0
      %v1345 = vadd.f32 %v1280, %v1344
      %v1346 = vpop.f32.mrf.mxu0
      %v1347 = vpop.f32.mrf.mxu0
      %v1348 = vadd.f32 %v1283, %v1347
      %v1349 = vpop.f32.mrf.mxu0
      %1350 = vmatprep.mubr.bf16.mxu0 0
      %1351 = vmatmul.mubr.bf16.gmra.mxu0 %v563
      %v1352 = vpop.f32.mrf.mxu0
      %v1353 = vadd.f32 %v1288, %v1352
      %v1354 = vpop.f32.mrf.mxu0
      %v1355 = vpop.f32.mrf.mxu0
      %v1356 = vadd.f32 %v1291, %v1355
      %v1357 = vpop.f32.mrf.mxu0
      %1358 = vmatprep.mubr.bf16.mxu0 0
      %1359 = vmatmul.mubr.bf16.gmra.mxu0 %v572
      %v1360 = vpop.f32.mrf.mxu0
      %v1361 = vadd.f32 %v1296, %v1360
      %v1362 = vpop.f32.mrf.mxu0
      %v1363 = vpop.f32.mrf.mxu0
      %v1364 = vadd.f32 %v1299, %v1363
      %v1365 = vpop.f32.mrf.mxu0
      %1366 = vmatprep.mubr.bf16.mxu0 0
      %1367 = vmatmul.mubr.bf16.gmra.mxu0 %v581
      %v1368 = vpop.f32.mrf.mxu0
      %v1369 = vadd.f32 %v1304, %v1368
      %v1370 = vpop.f32.mrf.mxu0
      %v1371 = vpop.f32.mrf.mxu0
      %v1372 = vadd.f32 %v1307, %v1371
      %v1373 = vpop.f32.mrf.mxu0
      %1374 = vdwg.mxu0
      %v1375 = vpack.c.bf16 %v1348, %v1345
      %v1376 = vpack.c.bf16 %v1356, %v1353
      %v1377 = vpack.c.bf16 %v1364, %v1361
      %v1378 = vpack.c.bf16 %v1372, %v1369
      %v1383 = vunpack.c.l.b16 %v1375
      %v1384 = vunpack.c.h.b16 %v1375
      %v1385 = vunpack.c.l.b16 %v1376
      %v1386 = vunpack.c.h.b16 %v1376
      %v1387 = vunpack.c.l.b16 %v1377
      %v1388 = vunpack.c.h.b16 %v1377
      %v1389 = vunpack.c.l.b16 %v1378
      %v1390 = vunpack.c.h.b16 %v1378
      %v1391 = vpack.c.b16 %v1383, %v1383
      %v1392 = vpack.c.b16 %v1384, %v1384
      %v1393 = vpack.c.b16 %v1385, %v1385
      %v1394 = vpack.c.b16 %v1386, %v1386
      %v1395 = vpack.c.b16 %v1387, %v1387
      %v1396 = vpack.c.b16 %v1388, %v1388
      %v1397 = vpack.c.b16 %v1389, %v1389
      %v1398 = vpack.c.b16 %v1390, %v1390
      %1407 = vst [vmem:[%s238] sm:$0xf] %v1391
      %1408 = vst [vmem:[%s238 + $0x4] sm:$0xf] %v1392
      %1409 = vst [vmem:[%s238 + $0x8] sm:$0xf] %v1393
      %1410 = vst [vmem:[%s238 + $0xc] sm:$0xf] %v1394
      %1411 = vst [vmem:[%s238 + $0x10] sm:$0xf] %v1395
      %1412 = vst [vmem:[%s238 + $0x14] sm:$0xf] %v1396
      %1413 = vst [vmem:[%s238 + $0x18] sm:$0xf] %v1397
      %1414 = vst [vmem:[%s238 + $0x1c] sm:$0xf] %v1398
      %p1415 = scmp.eq.s32.totalorder %s21, 0
      // Predicated region
      $region29: #{downsample_step.8} parent=27 // pred_check
        %p1416 = pneg %p1415
      $region30: #{downsample_step.8} parent=27 // pred_check_branch
        %1418 = sbr.rel (%p1416) target = $region32
      $region31: #{downsample_step.8} parent=27 // pred_region
        %1419 = vst [vmem:[%s244] sm:$0xff] 0.0
        %1420 = vst [vmem:[%s248] sm:$0xff] 0.0
      $region32: #{downsample_step.8} parent=27 // pred_fallthru
        _
      %v1421 = vld [vmem:[%s244] sm:$0xff]
      %v1422 = vadd.f32 %v1345, %v1348
      %v1423 = vadd.f32 %v1422, %v1353
      %v1424 = vadd.f32 %v1423, %v1356
      %v1425 = vadd.f32 %v1424, %v1361
      %v1426 = vadd.f32 %v1425, %v1364
      %v1427 = vadd.f32 %v1426, %v1369
      %v1428 = vadd.f32 %v1427, %v1372
      %v1429 = vadd.f32 %v1421, %v1428
      %1430 = vst [vmem:[%s244] sm:$0xff] %v1429
      %v1431 = vld [vmem:[%s248] sm:$0xff]
      %v1432 = vmul.f32 %v1345, %v1345
      %v1433 = vmul.f32 %v1348, %v1348
      %v1434 = vmul.f32 %v1353, %v1353
      %v1435 = vmul.f32 %v1356, %v1356
      %v1436 = vmul.f32 %v1361, %v1361
      %v1437 = vmul.f32 %v1364, %v1364
      %v1438 = vmul.f32 %v1369, %v1369
      %v1439 = vmul.f32 %v1372, %v1372
      %v1440 = vadd.f32 %v1432, %v1433
      %v1441 = vadd.f32 %v1440, %v1434
      %v1442 = vadd.f32 %v1441, %v1435
      %v1443 = vadd.f32 %v1442, %v1436
      %v1444 = vadd.f32 %v1443, %v1437
      %v1445 = vadd.f32 %v1444, %v1438
      %v1446 = vadd.f32 %v1445, %v1439
      %v1447 = vadd.f32 %v1431, %v1446
      %1448 = vst [vmem:[%s248] sm:$0xff] %v1447
      %s1449 = sadd.s32 %s20, %s21
      %s1450 = smul.u32 8, %s1449
      %p1451 = scmp.lt.s32.totalorder %s1450, 15
      %s1452 = scalar_select %p1451, %s1450, 15
      %s1453 = smul.addr %s1452, 4
      %s1454 = scalar_lea.vmem %s2, %s1453
      %p1455 = scmp.lt.s32.totalorder %s20, 1
      %s1456 = scalar_select %p1455, %s20, 1
      %s1457 = smul.addr %s1456, 8
      %s1458 = scalar_lea.vmem %s3, %s1457
      %p1459 = scmp.lt.s32.totalorder %s20, 1
      %s1460 = scalar_select %p1459, %s20, 1
      %s1461 = smul.addr %s1460, 8
      %s1462 = scalar_lea.vmem %s4, %s1461
      // Predicated region
      $region33: #{downsample_step.8} parent=27 // pred_check
        %p1463 = pneg %p97
      $region34: #{downsample_step.8} parent=27 // pred_check_branch
        %1465 = sbr.rel (%p1463) target = $region36
      $region35: #{downsample_step.8} parent=27 // pred_region
        %s1466 = sadd.s32 %s20, %s21
        %s1467 = smul.u32 8, %s1466
      $region36: #{downsample_step.8} parent=27 // pred_fallthru
        _
      // Predicated region
      $region37: #{downsample_step.8} parent=27 // pred_check
        %p1468 = pneg %p123
      $region38: #{downsample_step.8} parent=27 // pred_check_branch
        %1470 = sbr.rel (%p1468) target = $region40
      $region39: #{downsample_step.8} parent=27 // pred_region
        _
      $region40: #{downsample_step.8} parent=27 // pred_fallthru
        _
      // Predicated region
      $region41: #{downsample_step.8} parent=27 // pred_check
        %p1471 = pneg %p149
      $region42: #{downsample_step.8} parent=27 // pred_check_branch
        %1473 = sbr.rel (%p1471) target = $region44
      $region43: #{downsample_step.8} parent=27 // pred_region
        _
      $region44: #{downsample_step.8} parent=27 // pred_fallthru
        _
    $region28: #{downsample_step.8} parent=5 // pred_fallthru
      _
    %p1474 = scmp.le.s32.totalorder 2, %s11
    // Predicated region
    $region45: #{downsample_step.8} parent=5 // pred_check
      %p1475 = pneg %p1474
    $region46: #{downsample_step.8} parent=5 // pred_check_branch
      %1477 = sbr.rel (%p1475) target = $region48
    $region47: #{downsample_step.8} parent=5 // pred_region
      %s1478 = ssub.s32 %s11, 2
      // Predicated region
      $region49: #{downsample_step.8} parent=47 // pred_check
        %p1479 = pneg %p103
      $region50: #{downsample_step.8} parent=47 // pred_check_branch
        %1481 = sbr.rel (%p1479) target = $region52
      $region51: #{downsample_step.8} parent=47 // pred_region
        %s1482 = sadd.s32 %s22, %s23
        %s1483 = smul.u32 8, %s1482
        %p1484 = scmp.lt.s32.totalorder %s1483, 15
        %s1485 = scalar_select %p1484, %s1483, 15
        %s1486 = smul.addr %s1485, 4
        %s1487 = scalar_lea.vmem %s2, %s1486
      $region52: #{downsample_step.8} parent=47 // pred_fallthru
        _
      // Predicated region
      $region53: #{downsample_step.8} parent=47 // pred_check
        %p1488 = pneg %p129
      $region54: #{downsample_step.8} parent=47 // pred_check_branch
        %1490 = sbr.rel (%p1488) target = $region56
      $region55: #{downsample_step.8} parent=47 // pred_region
        %p1491 = scmp.lt.s32.totalorder %s22, 1
        %s1492 = scalar_select %p1491, %s22, 1
        %s1493 = smul.addr %s1492, 8
        %s1494 = scalar_lea.vmem %s3, %s1493
      $region56: #{downsample_step.8} parent=47 // pred_fallthru
        _
      // Predicated region
      $region57: #{downsample_step.8} parent=47 // pred_check
        %p1495 = pneg %p155
      $region58: #{downsample_step.8} parent=47 // pred_check_branch
        %1497 = sbr.rel (%p1495) target = $region60
      $region59: #{downsample_step.8} parent=47 // pred_region
        %p1498 = scmp.lt.s32.totalorder %s22, 1
        %s1499 = scalar_select %p1498, %s22, 1
        %s1500 = smul.addr %s1499, 8
        %s1501 = scalar_lea.vmem %s4, %s1500
      $region60: #{downsample_step.8} parent=47 // pred_fallthru
        _
    $region48: #{downsample_step.8} parent=5 // pred_fallthru
      _
  $region6: #{downsample_step.8} parent=0 // loop_footer
    %s15 = sadd.s32 1, %s11
  $region7: #{downsample_step.8} parent=0 // loop_footer_branch
    %10 = sbr.rel target = $region3
  $region8: #{downsample_step.8} parent=0 // loop_exit
    _

</llo_original>
